<compile_context>
chip_gen: v7x
topology: tpu7x:2x2x1
jax: 0.10.0
libtpu: 0.0.40
codegen_flags: <defaults>
</compile_context>

<pallas_src>
import functools

import jax
import jax.numpy as jnp
import numpy as np
from jax.experimental import pallas as pl
from jax.experimental.pallas import tpu as pltpu


def _cbam_kernel(x_ref, col_ref, row_ref, w1_ref, b1_ref, w2_ref, b2_ref,
                 wconv_ref, bconv_ref, o_ref, *, H, W, Bt):
    HW = H * W

    # Small weights / constants, loaded once per grid step.
    w1 = w1_ref[...]            # (CH, C)  fc1.weight (PyTorch layout)
    b1 = b1_ref[...]            # (CH, 1)
    w2 = w2_ref[...]            # (C, CH)  fc2.weight
    b2 = b2_ref[...]            # (C, 1)
    col = col_ref[...]          # (1, HW) int32: p %  W
    row = row_ref[...]          # (1, HW) int32: p // W

    # Border masks for the 7x7 conv, hoisted out of the per-image loop.
    col_masks, row_masks = [], []
    for d in range(7):
        off = d - 3
        if off == 0:
            col_masks.append(None)
            row_masks.append(None)
        else:
            col_masks.append(jnp.logical_and(col + off >= 0, col + off < W))
            row_masks.append(jnp.logical_and(row + off >= 0, row + off < H))

    for b in range(Bt):
        x = x_ref[b]                                       # (C, HW)

        # ---------------- Channel attention ----------------
        avg = jnp.mean(x, axis=1, keepdims=True)           # (C, 1)
        mx = jnp.max(x, axis=1, keepdims=True)             # (C, 1)
        pooled = jnp.concatenate([avg, mx], axis=1)        # (C, 2) - fused MLP
        h = jnp.dot(w1, pooled, preferred_element_type=jnp.float32) + b1
        h = jnp.maximum(h, 0.0)                            # (CH, 2)
        o = jnp.dot(w2, h, preferred_element_type=jnp.float32) + b2   # (C, 2)
        ca = jax.nn.sigmoid(jnp.sum(o, axis=1, keepdims=True))        # (C, 1)
        x1 = x * ca                                        # channel gate

        # ---------------- Spatial attention ----------------
        avg_c = jnp.mean(x1, axis=0, keepdims=True)        # (1, HW)
        max_c = jnp.max(x1, axis=0, keepdims=True)         # (1, HW)

        # dx-shifted, column-masked copies of both pooled planes (7 rolls each).
        ta, tm = [], []
        for dx in range(7):
            off = dx - 3
            if off == 0:
                ta.append(avg_c)
                tm.append(max_c)
            else:
                sh = (-off) % HW
                m = col_masks[dx]
                ta.append(jnp.where(m, pltpu.roll(avg_c, shift=sh, axis=1), 0.0))
                tm.append(jnp.where(m, pltpu.roll(max_c, shift=sh, axis=1), 0.0))

        # Per-dy weighted combination, then one shared dy-roll (7 more rolls).
        acc = jnp.zeros((1, HW), jnp.float32)
        for dy in range(7):
            off = dy - 3
            s = jnp.zeros((1, HW), jnp.float32)
            for dx in range(7):
                s = s + wconv_ref[dy * 7 + dx] * ta[dx]
                s = s + wconv_ref[49 + dy * 7 + dx] * tm[dx]
            if off == 0:
                acc = acc + s
            else:
                sh = (-off * W) % HW
                acc = acc + jnp.where(row_masks[dy],
                                      pltpu.roll(s, shift=sh, axis=1), 0.0)

        sa = jax.nn.sigmoid(acc + bconv_ref[0])            # (1, HW)
        o_ref[b] = x1 * sa                                 # spatial gate


def _pick_batch_tile(batch, per_image_bytes, target_bytes=2 << 20):
    """Largest divisor of `batch` whose block stays under `target_bytes`,
    keeping at least two grid steps when possible (megacore / v7x)."""
    best = 1
    for d in range(1, batch + 1):
        if batch % d == 0 and d * per_image_bytes <= target_bytes:
            best = d
    if best == batch and batch > 1:
        for d in range(batch // 2, 0, -1):
            if batch % d == 0 and d * per_image_bytes <= target_bytes:
                return d
    return best


def cbam_pallas(x_nchw, params):
    """CBAM forward. x_nchw: [B, C, H, W] float32. Returns [B, C, H, W]."""
    w1, b1, w2, b2, wconv, bconv = params    # PyTorch-native layouts
    B, C, H, W = x_nchw.shape
    CH = w1.shape[0]
    HW = H * W

    # Free reshapes (contiguous minor-dim merges) - no transposes, no extra HBM traffic.
    x_flat = x_nchw.reshape(B, C, HW)
    b1c = b1.reshape(CH, 1)
    b2c = b2.reshape(C, 1)
    wconv_flat = wconv.reshape(2 * 7 * 7)

    # Static row/col index vectors for conv border masking (host constants).
    col_ids = jnp.asarray(np.tile(np.arange(W, dtype=np.int32), H).reshape(1, HW))
    row_ids = jnp.asarray(np.repeat(np.arange(H, dtype=np.int32), W).reshape(1, HW))

    per_image_bytes = C * HW * 4
    Bt = _pick_batch_tile(B, per_image_bytes)
    grid = (B // Bt,)
    block_bytes = Bt * per_image_bytes
    vmem_limit = int(min(max(6 * block_bytes + (1 << 20), 32 << 20), 48 << 20))

    kernel = functools.partial(_cbam_kernel, H=H, W=W, Bt=Bt)

    out = pl.pallas_call(
        kernel,
        out_shape=jax.ShapeDtypeStruct((B, C, HW), jnp.float32),
        grid_spec=pltpu.PrefetchScalarGridSpec(
            num_scalar_prefetch=0,
            grid=grid,
            in_specs=[
                pl.BlockSpec((Bt, C, HW), lambda i: (i, 0, 0)),   # x (flattened NCHW)
                pl.BlockSpec((1, HW), lambda i: (0, 0)),          # col ids
                pl.BlockSpec((1, HW), lambda i: (0, 0)),          # row ids
                pl.BlockSpec((CH, C), lambda i: (0, 0)),          # fc1 weight
                pl.BlockSpec((CH, 1), lambda i: (0, 0)),          # fc1 bias
                pl.BlockSpec((C, CH), lambda i: (0, 0)),          # fc2 weight
                pl.BlockSpec((C, 1), lambda i: (0, 0)),           # fc2 bias
                pl.BlockSpec(memory_space=pltpu.SMEM),            # conv weight (98,)
                pl.BlockSpec(memory_space=pltpu.SMEM),            # conv bias (1,)
            ],
            out_specs=pl.BlockSpec((Bt, C, HW), lambda i: (i, 0, 0)),
        ),
        compiler_params=pltpu.CompilerParams(
            dimension_semantics=("parallel",),
            vmem_limit_bytes=vmem_limit),
    )(x_flat, col_ids, row_ids, w1, b1c, w2, b2c, wconv_flat, bconv)

    return out.reshape(B, C, H, W)


def cbam_reference(x, params):
    """Pure-JAX reference matching the PyTorch module semantics (NCHW)."""
    w1, b1, w2, b2, wconv, bconv = params
    B, C, H, W = x.shape

    avg = jnp.mean(x, axis=(2, 3))
    mx = jnp.max(x, axis=(2, 3))

    def fc(v):
        return jnp.maximum(v @ w1.T + b1, 0.0) @ w2.T + b2

    ca = jax.nn.sigmoid(fc(avg) + fc(mx))                   # (B, C)
    x1 = x * ca[:, :, None, None]

    avg_c = jnp.mean(x1, axis=1)                            # (B, H, W)
    max_c = jnp.max(x1, axis=1)                             # (B, H, W)
    wk = wconv.reshape(2, 7, 7)
    pa = jnp.pad(avg_c, ((0, 0), (3, 3), (3, 3)))
    pm = jnp.pad(max_c, ((0, 0), (3, 3), (3, 3)))
    acc = jnp.zeros((B, H, W), jnp.float32)
    for dy in range(7):
        for dx in range(7):
            acc = acc + wk[0, dy, dx] * pa[:, dy:dy + H, dx:dx + W]
            acc = acc + wk[1, dy, dx] * pm[:, dy:dy + H, dx:dx + W]
    sa = jax.nn.sigmoid(acc + bconv[0])
    return x1 * sa[:, None, :, :]


def make_params(channels, reduction_ratio, key):
    hidden = channels // reduction_ratio
    ks = jax.random.split(key, 6)
    # PyTorch-native layouts: Linear.weight is (out, in); Conv2d.weight is (1,2,7,7).
    w1 = 0.2 * jax.random.normal(ks[0], (hidden, channels), jnp.float32)
    b1 = 0.1 * jax.random.normal(ks[1], (hidden,), jnp.float32)
    w2 = 0.2 * jax.random.normal(ks[2], (channels, hidden), jnp.float32)
    b2 = 0.1 * jax.random.normal(ks[3], (channels,), jnp.float32)
    wconv = 0.1 * jax.random.normal(ks[4], (1, 2, 7, 7), jnp.float32)
    bconv = 0.1 * jax.random.normal(ks[5], (1,), jnp.float32)
    return (w1, b1, w2, b2, wconv, bconv)


if __name__ == "__main__":
    B, C, H, W = 2, 8, 16, 16
    reduction_ratio = 2  # channels // ratio must be >= 1 at this small size

    key = jax.random.PRNGKey(0)
    kx, kp = jax.random.split(key)
    x = jax.random.normal(kx, (B, C, H, W), jnp.float32)
    params = make_params(C, reduction_ratio, kp)

    out = jax.block_until_ready(cbam_pallas(x, params))
    ref = jax.block_until_ready(cbam_reference(x, params))
    np.testing.assert_allclose(np.asarray(out), np.asarray(ref),
                               rtol=1e-5, atol=1e-5)

    print("KERNEL_OK")
</pallas_src>

<mosaic_0001>
module attributes {stable_mosaic.version = 11 : i64} {
  func.func @_cbam_kernel(%arg0: i32, %arg1: memref<1x8x256xf32, #tpu.memory_space<vmem>>, %arg2: memref<1x256xi32, #tpu.memory_space<vmem>>, %arg3: memref<1x256xi32, #tpu.memory_space<vmem>>, %arg4: memref<4x8xf32, #tpu.memory_space<vmem>>, %arg5: memref<4x1xf32, #tpu.memory_space<vmem>>, %arg6: memref<8x4xf32, #tpu.memory_space<vmem>>, %arg7: memref<8x1xf32, #tpu.memory_space<vmem>>, %arg8: memref<98xf32, #tpu.memory_space<smem>>, %arg9: memref<1xf32, #tpu.memory_space<smem>>, %arg10: memref<1x8x256xf32, #tpu.memory_space<vmem>>) attributes {dimension_semantics = [#tpu.dimension_semantics<parallel>], iteration_bounds = array<i64: 2>, scalar_prefetch = 0 : i64, scratch_operands = 0 : i64, tpu.core_type = #tpu.core_type<tc>, window_params = [{transform_indices = @transform_0, window_bounds = array<i64: 1, 8, 256>}, {pipeline_mode = #tpu.pipeline_mode<synchronous>, transform_indices = @transform_1, window_bounds = array<i64: 1, 256>}, {pipeline_mode = #tpu.pipeline_mode<synchronous>, transform_indices = @transform_2, window_bounds = array<i64: 1, 256>}, {pipeline_mode = #tpu.pipeline_mode<synchronous>, transform_indices = @transform_3, window_bounds = array<i64: 4, 8>}, {pipeline_mode = #tpu.pipeline_mode<synchronous>, transform_indices = @transform_4, window_bounds = array<i64: 4, 1>}, {pipeline_mode = #tpu.pipeline_mode<synchronous>, transform_indices = @transform_5, window_bounds = array<i64: 8, 4>}, {pipeline_mode = #tpu.pipeline_mode<synchronous>, transform_indices = @transform_6, window_bounds = array<i64: 8, 1>}, {transform_indices = @transform_7, window_bounds = array<i64: 98>}, {transform_indices = @transform_8, window_bounds = array<i64: 1>}, {transform_indices = @transform_9, window_bounds = array<i64: 1, 8, 256>}]} {
    %c0 = arith.constant 0 : index
    %c0_0 = arith.constant 0 : index
    %0 = vector.load %arg4[%c0, %c0_0] : memref<4x8xf32, #tpu.memory_space<vmem>>, vector<4x8xf32>
    %c0_1 = arith.constant 0 : index
    %c0_2 = arith.constant 0 : index
    %1 = vector.load %arg5[%c0_1, %c0_2] : memref<4x1xf32, #tpu.memory_space<vmem>>, vector<4x1xf32>
    %c0_3 = arith.constant 0 : index
    %c0_4 = arith.constant 0 : index
    %2 = vector.load %arg6[%c0_3, %c0_4] : memref<8x4xf32, #tpu.memory_space<vmem>>, vector<8x4xf32>
    %c0_5 = arith.constant 0 : index
    %c0_6 = arith.constant 0 : index
    %3 = vector.load %arg7[%c0_5, %c0_6] : memref<8x1xf32, #tpu.memory_space<vmem>>, vector<8x1xf32>
    %c0_7 = arith.constant 0 : index
    %c0_8 = arith.constant 0 : index
    %4 = vector.load %arg2[%c0_7, %c0_8] : memref<1x256xi32, #tpu.memory_space<vmem>>, vector<1x256xi32>
    %c0_9 = arith.constant 0 : index
    %c0_10 = arith.constant 0 : index
    %5 = vector.load %arg3[%c0_9, %c0_10] : memref<1x256xi32, #tpu.memory_space<vmem>>, vector<1x256xi32>
    %c-3_i32 = arith.constant -3 : i32
    %6 = vector.broadcast %c-3_i32 : i32 to vector<1x256xi32>
    %7 = arith.addi %4, %6 : vector<1x256xi32>
    %c0_i32 = arith.constant 0 : i32
    %8 = vector.broadcast %c0_i32 : i32 to vector<1x256xi32>
    %9 = arith.cmpi sge, %7, %8 : vector<1x256xi32>
    %c-3_i32_11 = arith.constant -3 : i32
    %10 = vector.broadcast %c-3_i32_11 : i32 to vector<1x256xi32>
    %11 = arith.addi %4, %10 : vector<1x256xi32>
    %c16_i32 = arith.constant 16 : i32
    %12 = vector.broadcast %c16_i32 : i32 to vector<1x256xi32>
    %13 = arith.cmpi slt, %11, %12 : vector<1x256xi32>
    %14 = arith.andi %9, %13 : vector<1x256xi1>
    %c-3_i32_12 = arith.constant -3 : i32
    %15 = vector.broadcast %c-3_i32_12 : i32 to vector<1x256xi32>
    %16 = arith.addi %5, %15 : vector<1x256xi32>
    %c0_i32_13 = arith.constant 0 : i32
    %17 = vector.broadcast %c0_i32_13 : i32 to vector<1x256xi32>
    %18 = arith.cmpi sge, %16, %17 : vector<1x256xi32>
    %c-3_i32_14 = arith.constant -3 : i32
    %19 = vector.broadcast %c-3_i32_14 : i32 to vector<1x256xi32>
    %20 = arith.addi %5, %19 : vector<1x256xi32>
    %c16_i32_15 = arith.constant 16 : i32
    %21 = vector.broadcast %c16_i32_15 : i32 to vector<1x256xi32>
    %22 = arith.cmpi slt, %20, %21 : vector<1x256xi32>
    %23 = arith.andi %18, %22 : vector<1x256xi1>
    %c-2_i32 = arith.constant -2 : i32
    %24 = vector.broadcast %c-2_i32 : i32 to vector<1x256xi32>
    %25 = arith.addi %4, %24 : vector<1x256xi32>
    %c0_i32_16 = arith.constant 0 : i32
    %26 = vector.broadcast %c0_i32_16 : i32 to vector<1x256xi32>
    %27 = arith.cmpi sge, %25, %26 : vector<1x256xi32>
    %c-2_i32_17 = arith.constant -2 : i32
    %28 = vector.broadcast %c-2_i32_17 : i32 to vector<1x256xi32>
    %29 = arith.addi %4, %28 : vector<1x256xi32>
    %c16_i32_18 = arith.constant 16 : i32
    %30 = vector.broadcast %c16_i32_18 : i32 to vector<1x256xi32>
    %31 = arith.cmpi slt, %29, %30 : vector<1x256xi32>
    %32 = arith.andi %27, %31 : vector<1x256xi1>
    %c-2_i32_19 = arith.constant -2 : i32
    %33 = vector.broadcast %c-2_i32_19 : i32 to vector<1x256xi32>
    %34 = arith.addi %5, %33 : vector<1x256xi32>
    %c0_i32_20 = arith.constant 0 : i32
    %35 = vector.broadcast %c0_i32_20 : i32 to vector<1x256xi32>
    %36 = arith.cmpi sge, %34, %35 : vector<1x256xi32>
    %c-2_i32_21 = arith.constant -2 : i32
    %37 = vector.broadcast %c-2_i32_21 : i32 to vector<1x256xi32>
    %38 = arith.addi %5, %37 : vector<1x256xi32>
    %c16_i32_22 = arith.constant 16 : i32
    %39 = vector.broadcast %c16_i32_22 : i32 to vector<1x256xi32>
    %40 = arith.cmpi slt, %38, %39 : vector<1x256xi32>
    %41 = arith.andi %36, %40 : vector<1x256xi1>
    %c-1_i32 = arith.constant -1 : i32
    %42 = vector.broadcast %c-1_i32 : i32 to vector<1x256xi32>
    %43 = arith.addi %4, %42 : vector<1x256xi32>
    %c0_i32_23 = arith.constant 0 : i32
    %44 = vector.broadcast %c0_i32_23 : i32 to vector<1x256xi32>
    %45 = arith.cmpi sge, %43, %44 : vector<1x256xi32>
    %c-1_i32_24 = arith.constant -1 : i32
    %46 = vector.broadcast %c-1_i32_24 : i32 to vector<1x256xi32>
    %47 = arith.addi %4, %46 : vector<1x256xi32>
    %c16_i32_25 = arith.constant 16 : i32
    %48 = vector.broadcast %c16_i32_25 : i32 to vector<1x256xi32>
    %49 = arith.cmpi slt, %47, %48 : vector<1x256xi32>
    %50 = arith.andi %45, %49 : vector<1x256xi1>
    %c-1_i32_26 = arith.constant -1 : i32
    %51 = vector.broadcast %c-1_i32_26 : i32 to vector<1x256xi32>
    %52 = arith.addi %5, %51 : vector<1x256xi32>
    %c0_i32_27 = arith.constant 0 : i32
    %53 = vector.broadcast %c0_i32_27 : i32 to vector<1x256xi32>
    %54 = arith.cmpi sge, %52, %53 : vector<1x256xi32>
    %c-1_i32_28 = arith.constant -1 : i32
    %55 = vector.broadcast %c-1_i32_28 : i32 to vector<1x256xi32>
    %56 = arith.addi %5, %55 : vector<1x256xi32>
    %c16_i32_29 = arith.constant 16 : i32
    %57 = vector.broadcast %c16_i32_29 : i32 to vector<1x256xi32>
    %58 = arith.cmpi slt, %56, %57 : vector<1x256xi32>
    %59 = arith.andi %54, %58 : vector<1x256xi1>
    %c1_i32 = arith.constant 1 : i32
    %60 = vector.broadcast %c1_i32 : i32 to vector<1x256xi32>
    %61 = arith.addi %4, %60 : vector<1x256xi32>
    %c0_i32_30 = arith.constant 0 : i32
    %62 = vector.broadcast %c0_i32_30 : i32 to vector<1x256xi32>
    %63 = arith.cmpi sge, %61, %62 : vector<1x256xi32>
    %c1_i32_31 = arith.constant 1 : i32
    %64 = vector.broadcast %c1_i32_31 : i32 to vector<1x256xi32>
    %65 = arith.addi %4, %64 : vector<1x256xi32>
    %c16_i32_32 = arith.constant 16 : i32
    %66 = vector.broadcast %c16_i32_32 : i32 to vector<1x256xi32>
    %67 = arith.cmpi slt, %65, %66 : vector<1x256xi32>
    %68 = arith.andi %63, %67 : vector<1x256xi1>
    %c1_i32_33 = arith.constant 1 : i32
    %69 = vector.broadcast %c1_i32_33 : i32 to vector<1x256xi32>
    %70 = arith.addi %5, %69 : vector<1x256xi32>
    %c0_i32_34 = arith.constant 0 : i32
    %71 = vector.broadcast %c0_i32_34 : i32 to vector<1x256xi32>
    %72 = arith.cmpi sge, %70, %71 : vector<1x256xi32>
    %c1_i32_35 = arith.constant 1 : i32
    %73 = vector.broadcast %c1_i32_35 : i32 to vector<1x256xi32>
    %74 = arith.addi %5, %73 : vector<1x256xi32>
    %c16_i32_36 = arith.constant 16 : i32
    %75 = vector.broadcast %c16_i32_36 : i32 to vector<1x256xi32>
    %76 = arith.cmpi slt, %74, %75 : vector<1x256xi32>
    %77 = arith.andi %72, %76 : vector<1x256xi1>
    %c2_i32 = arith.constant 2 : i32
    %78 = vector.broadcast %c2_i32 : i32 to vector<1x256xi32>
    %79 = arith.addi %4, %78 : vector<1x256xi32>
    %c0_i32_37 = arith.constant 0 : i32
    %80 = vector.broadcast %c0_i32_37 : i32 to vector<1x256xi32>
    %81 = arith.cmpi sge, %79, %80 : vector<1x256xi32>
    %c2_i32_38 = arith.constant 2 : i32
    %82 = vector.broadcast %c2_i32_38 : i32 to vector<1x256xi32>
    %83 = arith.addi %4, %82 : vector<1x256xi32>
    %c16_i32_39 = arith.constant 16 : i32
    %84 = vector.broadcast %c16_i32_39 : i32 to vector<1x256xi32>
    %85 = arith.cmpi slt, %83, %84 : vector<1x256xi32>
    %86 = arith.andi %81, %85 : vector<1x256xi1>
    %c2_i32_40 = arith.constant 2 : i32
    %87 = vector.broadcast %c2_i32_40 : i32 to vector<1x256xi32>
    %88 = arith.addi %5, %87 : vector<1x256xi32>
    %c0_i32_41 = arith.constant 0 : i32
    %89 = vector.broadcast %c0_i32_41 : i32 to vector<1x256xi32>
    %90 = arith.cmpi sge, %88, %89 : vector<1x256xi32>
    %c2_i32_42 = arith.constant 2 : i32
    %91 = vector.broadcast %c2_i32_42 : i32 to vector<1x256xi32>
    %92 = arith.addi %5, %91 : vector<1x256xi32>
    %c16_i32_43 = arith.constant 16 : i32
    %93 = vector.broadcast %c16_i32_43 : i32 to vector<1x256xi32>
    %94 = arith.cmpi slt, %92, %93 : vector<1x256xi32>
    %95 = arith.andi %90, %94 : vector<1x256xi1>
    %c3_i32 = arith.constant 3 : i32
    %96 = vector.broadcast %c3_i32 : i32 to vector<1x256xi32>
    %97 = arith.addi %4, %96 : vector<1x256xi32>
    %c0_i32_44 = arith.constant 0 : i32
    %98 = vector.broadcast %c0_i32_44 : i32 to vector<1x256xi32>
    %99 = arith.cmpi sge, %97, %98 : vector<1x256xi32>
    %c3_i32_45 = arith.constant 3 : i32
    %100 = vector.broadcast %c3_i32_45 : i32 to vector<1x256xi32>
    %101 = arith.addi %4, %100 : vector<1x256xi32>
    %c16_i32_46 = arith.constant 16 : i32
    %102 = vector.broadcast %c16_i32_46 : i32 to vector<1x256xi32>
    %103 = arith.cmpi slt, %101, %102 : vector<1x256xi32>
    %104 = arith.andi %99, %103 : vector<1x256xi1>
    %c3_i32_47 = arith.constant 3 : i32
    %105 = vector.broadcast %c3_i32_47 : i32 to vector<1x256xi32>
    %106 = arith.addi %5, %105 : vector<1x256xi32>
    %c0_i32_48 = arith.constant 0 : i32
    %107 = vector.broadcast %c0_i32_48 : i32 to vector<1x256xi32>
    %108 = arith.cmpi sge, %106, %107 : vector<1x256xi32>
    %c3_i32_49 = arith.constant 3 : i32
    %109 = vector.broadcast %c3_i32_49 : i32 to vector<1x256xi32>
    %110 = arith.addi %5, %109 : vector<1x256xi32>
    %c16_i32_50 = arith.constant 16 : i32
    %111 = vector.broadcast %c16_i32_50 : i32 to vector<1x256xi32>
    %112 = arith.cmpi slt, %110, %111 : vector<1x256xi32>
    %113 = arith.andi %108, %112 : vector<1x256xi1>
    %c0_51 = arith.constant 0 : index
    %c0_52 = arith.constant 0 : index
    %c0_53 = arith.constant 0 : index
    %114 = vector.load %arg1[%c0_51, %c0_52, %c0_53] : memref<1x8x256xf32, #tpu.memory_space<vmem>>, vector<1x8x256xf32>
    %115 = vector.shape_cast %114 : vector<1x8x256xf32> to vector<8x256xf32>
    %cst = arith.constant dense<0.000000e+00> : vector<8xf32>
    %116 = vector.multi_reduction <add>, %115, %cst [1] : vector<8x256xf32> to vector<8xf32>
    %117 = vector.shape_cast %116 : vector<8xf32> to vector<8x1xf32>
    %cst_54 = arith.constant 2.560000e+02 : f32
    %118 = vector.broadcast %cst_54 : f32 to vector<8x1xf32>
    %119 = arith.divf %117, %118 : vector<8x1xf32>
    %cst_55 = arith.constant dense<0xFF800000> : vector<8xf32>
    %120 = vector.multi_reduction <maximumf>, %115, %cst_55 [1] : vector<8x256xf32> to vector<8xf32>
    %121 = vector.shape_cast %120 : vector<8xf32> to vector<8x1xf32>
    %122 = tpu.concatenate %119, %121 in 1 : vector<8x1xf32>, vector<8x1xf32> -> vector<8x2xf32>
    %cst_56 = arith.constant dense<0.000000e+00> : vector<4x2xf32>
    %123 = tpu.matmul %0, %122, %cst_56 {dimension_numbers = #tpu.dot_dimension_numbers<[1], [0], [0], [1], [0, 0, 1, 1], [], []>} : vector<4x8xf32>, vector<8x2xf32>, vector<4x2xf32> -> vector<4x2xf32>
    %124 = vector.broadcast %1 : vector<4x1xf32> to vector<4x2xf32>
    %125 = arith.addf %123, %124 : vector<4x2xf32>
    %cst_57 = arith.constant 0.000000e+00 : f32
    %126 = vector.broadcast %cst_57 : f32 to vector<4x2xf32>
    %127 = arith.maximumf %125, %126 : vector<4x2xf32>
    %cst_58 = arith.constant dense<0.000000e+00> : vector<8x2xf32>
    %128 = tpu.matmul %2, %127, %cst_58 {dimension_numbers = #tpu.dot_dimension_numbers<[1], [0], [0], [1], [0, 0, 1, 1], [], []>} : vector<8x4xf32>, vector<4x2xf32>, vector<8x2xf32> -> vector<8x2xf32>
    %129 = vector.broadcast %3 : vector<8x1xf32> to vector<8x2xf32>
    %130 = arith.addf %128, %129 : vector<8x2xf32>
    %cst_59 = arith.constant dense<0.000000e+00> : vector<8xf32>
    %131 = vector.multi_reduction <add>, %130, %cst_59 [1] : vector<8x2xf32> to vector<8xf32>
    %132 = vector.shape_cast %131 : vector<8xf32> to vector<8x1xf32>
    %133 = arith.negf %132 : vector<8x1xf32>
    %134 = math.exp %133 : vector<8x1xf32>
    %cst_60 = arith.constant 1.000000e+00 : f32
    %135 = vector.broadcast %cst_60 : f32 to vector<8x1xf32>
    %136 = arith.addf %135, %134 : vector<8x1xf32>
    %137 = arith.divf %135, %136 : vector<8x1xf32>
    %138 = vector.broadcast %137 : vector<8x1xf32> to vector<8x256xf32>
    %139 = arith.mulf %115, %138 : vector<8x256xf32>
    %cst_61 = arith.constant dense<0.000000e+00> : vector<256xf32>
    %140 = vector.multi_reduction <add>, %139, %cst_61 [0] : vector<8x256xf32> to vector<256xf32>
    %141 = vector.shape_cast %140 : vector<256xf32> to vector<1x256xf32>
    %cst_62 = arith.constant 8.000000e+00 : f32
    %142 = vector.broadcast %cst_62 : f32 to vector<1x256xf32>
    %143 = arith.divf %141, %142 : vector<1x256xf32>
    %cst_63 = arith.constant dense<0xFF800000> : vector<256xf32>
    %144 = vector.multi_reduction <maximumf>, %139, %cst_63 [0] : vector<8x256xf32> to vector<256xf32>
    %145 = vector.shape_cast %144 : vector<256xf32> to vector<1x256xf32>
    %c3_i32_64 = arith.constant 3 : i32
    %146 = tpu.dynamic_rotate %143 by %c3_i32_64 dim 1 : vector<1x256xf32>, i32 -> vector<1x256xf32>
    %cst_65 = arith.constant 0.000000e+00 : f32
    %147 = vector.broadcast %cst_65 : f32 to vector<1x256xf32>
    %148 = arith.select %14, %146, %147 : vector<1x256xi1>, vector<1x256xf32>
    %c3_i32_66 = arith.constant 3 : i32
    %149 = tpu.dynamic_rotate %145 by %c3_i32_66 dim 1 : vector<1x256xf32>, i32 -> vector<1x256xf32>
    %cst_67 = arith.constant 0.000000e+00 : f32
    %150 = vector.broadcast %cst_67 : f32 to vector<1x256xf32>
    %151 = arith.select %14, %149, %150 : vector<1x256xi1>, vector<1x256xf32>
    %c2_i32_68 = arith.constant 2 : i32
    %152 = tpu.dynamic_rotate %143 by %c2_i32_68 dim 1 : vector<1x256xf32>, i32 -> vector<1x256xf32>
    %cst_69 = arith.constant 0.000000e+00 : f32
    %153 = vector.broadcast %cst_69 : f32 to vector<1x256xf32>
    %154 = arith.select %32, %152, %153 : vector<1x256xi1>, vector<1x256xf32>
    %c2_i32_70 = arith.constant 2 : i32
    %155 = tpu.dynamic_rotate %145 by %c2_i32_70 dim 1 : vector<1x256xf32>, i32 -> vector<1x256xf32>
    %cst_71 = arith.constant 0.000000e+00 : f32
    %156 = vector.broadcast %cst_71 : f32 to vector<1x256xf32>
    %157 = arith.select %32, %155, %156 : vector<1x256xi1>, vector<1x256xf32>
    %c1_i32_72 = arith.constant 1 : i32
    %158 = tpu.dynamic_rotate %143 by %c1_i32_72 dim 1 : vector<1x256xf32>, i32 -> vector<1x256xf32>
    %cst_73 = arith.constant 0.000000e+00 : f32
    %159 = vector.broadcast %cst_73 : f32 to vector<1x256xf32>
    %160 = arith.select %50, %158, %159 : vector<1x256xi1>, vector<1x256xf32>
    %c1_i32_74 = arith.constant 1 : i32
    %161 = tpu.dynamic_rotate %145 by %c1_i32_74 dim 1 : vector<1x256xf32>, i32 -> vector<1x256xf32>
    %cst_75 = arith.constant 0.000000e+00 : f32
    %162 = vector.broadcast %cst_75 : f32 to vector<1x256xf32>
    %163 = arith.select %50, %161, %162 : vector<1x256xi1>, vector<1x256xf32>
    %c255_i32 = arith.constant 255 : i32
    %164 = tpu.dynamic_rotate %143 by %c255_i32 dim 1 : vector<1x256xf32>, i32 -> vector<1x256xf32>
    %cst_76 = arith.constant 0.000000e+00 : f32
    %165 = vector.broadcast %cst_76 : f32 to vector<1x256xf32>
    %166 = arith.select %68, %164, %165 : vector<1x256xi1>, vector<1x256xf32>
    %c255_i32_77 = arith.constant 255 : i32
    %167 = tpu.dynamic_rotate %145 by %c255_i32_77 dim 1 : vector<1x256xf32>, i32 -> vector<1x256xf32>
    %cst_78 = arith.constant 0.000000e+00 : f32
    %168 = vector.broadcast %cst_78 : f32 to vector<1x256xf32>
    %169 = arith.select %68, %167, %168 : vector<1x256xi1>, vector<1x256xf32>
    %c254_i32 = arith.constant 254 : i32
    %170 = tpu.dynamic_rotate %143 by %c254_i32 dim 1 : vector<1x256xf32>, i32 -> vector<1x256xf32>
    %cst_79 = arith.constant 0.000000e+00 : f32
    %171 = vector.broadcast %cst_79 : f32 to vector<1x256xf32>
    %172 = arith.select %86, %170, %171 : vector<1x256xi1>, vector<1x256xf32>
    %c254_i32_80 = arith.constant 254 : i32
    %173 = tpu.dynamic_rotate %145 by %c254_i32_80 dim 1 : vector<1x256xf32>, i32 -> vector<1x256xf32>
    %cst_81 = arith.constant 0.000000e+00 : f32
    %174 = vector.broadcast %cst_81 : f32 to vector<1x256xf32>
    %175 = arith.select %86, %173, %174 : vector<1x256xi1>, vector<1x256xf32>
    %c253_i32 = arith.constant 253 : i32
    %176 = tpu.dynamic_rotate %143 by %c253_i32 dim 1 : vector<1x256xf32>, i32 -> vector<1x256xf32>
    %cst_82 = arith.constant 0.000000e+00 : f32
    %177 = vector.broadcast %cst_82 : f32 to vector<1x256xf32>
    %178 = arith.select %104, %176, %177 : vector<1x256xi1>, vector<1x256xf32>
    %c253_i32_83 = arith.constant 253 : i32
    %179 = tpu.dynamic_rotate %145 by %c253_i32_83 dim 1 : vector<1x256xf32>, i32 -> vector<1x256xf32>
    %cst_84 = arith.constant 0.000000e+00 : f32
    %180 = vector.broadcast %cst_84 : f32 to vector<1x256xf32>
    %181 = arith.select %104, %179, %180 : vector<1x256xi1>, vector<1x256xf32>
    %cst_85 = arith.constant 0.000000e+00 : f32
    %182 = vector.broadcast %cst_85 : f32 to vector<1x256xf32>
    %cst_86 = arith.constant 0.000000e+00 : f32
    %183 = vector.broadcast %cst_86 : f32 to vector<1x256xf32>
    %c0_87 = arith.constant 0 : index
    %184 = memref.load %arg8[%c0_87] : memref<98xf32, #tpu.memory_space<smem>>
    %185 = vector.broadcast %184 : f32 to vector<1x256xf32>
    %186 = arith.mulf %185, %148 : vector<1x256xf32>
    %187 = arith.addf %183, %186 : vector<1x256xf32>
    %c49 = arith.constant 49 : index
    %188 = memref.load %arg8[%c49] : memref<98xf32, #tpu.memory_space<smem>>
    %189 = vector.broadcast %188 : f32 to vector<1x256xf32>
    %190 = arith.mulf %189, %151 : vector<1x256xf32>
    %191 = arith.addf %187, %190 : vector<1x256xf32>
    %c1 = arith.constant 1 : index
    %192 = memref.load %arg8[%c1] : memref<98xf32, #tpu.memory_space<smem>>
    %193 = vector.broadcast %192 : f32 to vector<1x256xf32>
    %194 = arith.mulf %193, %154 : vector<1x256xf32>
    %195 = arith.addf %191, %194 : vector<1x256xf32>
    %c50 = arith.constant 50 : index
    %196 = memref.load %arg8[%c50] : memref<98xf32, #tpu.memory_space<smem>>
    %197 = vector.broadcast %196 : f32 to vector<1x256xf32>
    %198 = arith.mulf %197, %157 : vector<1x256xf32>
    %199 = arith.addf %195, %198 : vector<1x256xf32>
    %c2 = arith.constant 2 : index
    %200 = memref.load %arg8[%c2] : memref<98xf32, #tpu.memory_space<smem>>
    %201 = vector.broadcast %200 : f32 to vector<1x256xf32>
    %202 = arith.mulf %201, %160 : vector<1x256xf32>
    %203 = arith.addf %199, %202 : vector<1x256xf32>
    %c51 = arith.constant 51 : index
    %204 = memref.load %arg8[%c51] : memref<98xf32, #tpu.memory_space<smem>>
    %205 = vector.broadcast %204 : f32 to vector<1x256xf32>
    %206 = arith.mulf %205, %163 : vector<1x256xf32>
    %207 = arith.addf %203, %206 : vector<1x256xf32>
    %c3 = arith.constant 3 : index
    %208 = memref.load %arg8[%c3] : memref<98xf32, #tpu.memory_space<smem>>
    %209 = vector.broadcast %208 : f32 to vector<1x256xf32>
    %210 = arith.mulf %209, %143 : vector<1x256xf32>
    %211 = arith.addf %207, %210 : vector<1x256xf32>
    %c52 = arith.constant 52 : index
    %212 = memref.load %arg8[%c52] : memref<98xf32, #tpu.memory_space<smem>>
    %213 = vector.broadcast %212 : f32 to vector<1x256xf32>
    %214 = arith.mulf %213, %145 : vector<1x256xf32>
    %215 = arith.addf %211, %214 : vector<1x256xf32>
    %c4 = arith.constant 4 : index
    %216 = memref.load %arg8[%c4] : memref<98xf32, #tpu.memory_space<smem>>
    %217 = vector.broadcast %216 : f32 to vector<1x256xf32>
    %218 = arith.mulf %217, %166 : vector<1x256xf32>
    %219 = arith.addf %215, %218 : vector<1x256xf32>
    %c53 = arith.constant 53 : index
    %220 = memref.load %arg8[%c53] : memref<98xf32, #tpu.memory_space<smem>>
    %221 = vector.broadcast %220 : f32 to vector<1x256xf32>
    %222 = arith.mulf %221, %169 : vector<1x256xf32>
    %223 = arith.addf %219, %222 : vector<1x256xf32>
    %c5 = arith.constant 5 : index
    %224 = memref.load %arg8[%c5] : memref<98xf32, #tpu.memory_space<smem>>
    %225 = vector.broadcast %224 : f32 to vector<1x256xf32>
    %226 = arith.mulf %225, %172 : vector<1x256xf32>
    %227 = arith.addf %223, %226 : vector<1x256xf32>
    %c54 = arith.constant 54 : index
    %228 = memref.load %arg8[%c54] : memref<98xf32, #tpu.memory_space<smem>>
    %229 = vector.broadcast %228 : f32 to vector<1x256xf32>
    %230 = arith.mulf %229, %175 : vector<1x256xf32>
    %231 = arith.addf %227, %230 : vector<1x256xf32>
    %c6 = arith.constant 6 : index
    %232 = memref.load %arg8[%c6] : memref<98xf32, #tpu.memory_space<smem>>
    %233 = vector.broadcast %232 : f32 to vector<1x256xf32>
    %234 = arith.mulf %233, %178 : vector<1x256xf32>
    %235 = arith.addf %231, %234 : vector<1x256xf32>
    %c55 = arith.constant 55 : index
    %236 = memref.load %arg8[%c55] : memref<98xf32, #tpu.memory_space<smem>>
    %237 = vector.broadcast %236 : f32 to vector<1x256xf32>
    %238 = arith.mulf %237, %181 : vector<1x256xf32>
    %239 = arith.addf %235, %238 : vector<1x256xf32>
    %c48_i32 = arith.constant 48 : i32
    %240 = tpu.dynamic_rotate %239 by %c48_i32 dim 1 : vector<1x256xf32>, i32 -> vector<1x256xf32>
    %cst_88 = arith.constant 0.000000e+00 : f32
    %241 = vector.broadcast %cst_88 : f32 to vector<1x256xf32>
    %242 = arith.select %23, %240, %241 : vector<1x256xi1>, vector<1x256xf32>
    %243 = arith.addf %182, %242 : vector<1x256xf32>
    %cst_89 = arith.constant 0.000000e+00 : f32
    %244 = vector.broadcast %cst_89 : f32 to vector<1x256xf32>
    %c7 = arith.constant 7 : index
    %245 = memref.load %arg8[%c7] : memref<98xf32, #tpu.memory_space<smem>>
    %246 = vector.broadcast %245 : f32 to vector<1x256xf32>
    %247 = arith.mulf %246, %148 : vector<1x256xf32>
    %248 = arith.addf %244, %247 : vector<1x256xf32>
    %c56 = arith.constant 56 : index
    %249 = memref.load %arg8[%c56] : memref<98xf32, #tpu.memory_space<smem>>
    %250 = vector.broadcast %249 : f32 to vector<1x256xf32>
    %251 = arith.mulf %250, %151 : vector<1x256xf32>
    %252 = arith.addf %248, %251 : vector<1x256xf32>
    %c8 = arith.constant 8 : index
    %253 = memref.load %arg8[%c8] : memref<98xf32, #tpu.memory_space<smem>>
    %254 = vector.broadcast %253 : f32 to vector<1x256xf32>
    %255 = arith.mulf %254, %154 : vector<1x256xf32>
    %256 = arith.addf %252, %255 : vector<1x256xf32>
    %c57 = arith.constant 57 : index
    %257 = memref.load %arg8[%c57] : memref<98xf32, #tpu.memory_space<smem>>
    %258 = vector.broadcast %257 : f32 to vector<1x256xf32>
    %259 = arith.mulf %258, %157 : vector<1x256xf32>
    %260 = arith.addf %256, %259 : vector<1x256xf32>
    %c9 = arith.constant 9 : index
    %261 = memref.load %arg8[%c9] : memref<98xf32, #tpu.memory_space<smem>>
    %262 = vector.broadcast %261 : f32 to vector<1x256xf32>
    %263 = arith.mulf %262, %160 : vector<1x256xf32>
    %264 = arith.addf %260, %263 : vector<1x256xf32>
    %c58 = arith.constant 58 : index
    %265 = memref.load %arg8[%c58] : memref<98xf32, #tpu.memory_space<smem>>
    %266 = vector.broadcast %265 : f32 to vector<1x256xf32>
    %267 = arith.mulf %266, %163 : vector<1x256xf32>
    %268 = arith.addf %264, %267 : vector<1x256xf32>
    %c10 = arith.constant 10 : index
    %269 = memref.load %arg8[%c10] : memref<98xf32, #tpu.memory_space<smem>>
    %270 = vector.broadcast %269 : f32 to vector<1x256xf32>
    %271 = arith.mulf %270, %143 : vector<1x256xf32>
    %272 = arith.addf %268, %271 : vector<1x256xf32>
    %c59 = arith.constant 59 : index
    %273 = memref.load %arg8[%c59] : memref<98xf32, #tpu.memory_space<smem>>
    %274 = vector.broadcast %273 : f32 to vector<1x256xf32>
    %275 = arith.mulf %274, %145 : vector<1x256xf32>
    %276 = arith.addf %272, %275 : vector<1x256xf32>
    %c11 = arith.constant 11 : index
    %277 = memref.load %arg8[%c11] : memref<98xf32, #tpu.memory_space<smem>>
    %278 = vector.broadcast %277 : f32 to vector<1x256xf32>
    %279 = arith.mulf %278, %166 : vector<1x256xf32>
    %280 = arith.addf %276, %279 : vector<1x256xf32>
    %c60 = arith.constant 60 : index
    %281 = memref.load %arg8[%c60] : memref<98xf32, #tpu.memory_space<smem>>
    %282 = vector.broadcast %281 : f32 to vector<1x256xf32>
    %283 = arith.mulf %282, %169 : vector<1x256xf32>
    %284 = arith.addf %280, %283 : vector<1x256xf32>
    %c12 = arith.constant 12 : index
    %285 = memref.load %arg8[%c12] : memref<98xf32, #tpu.memory_space<smem>>
    %286 = vector.broadcast %285 : f32 to vector<1x256xf32>
    %287 = arith.mulf %286, %172 : vector<1x256xf32>
    %288 = arith.addf %284, %287 : vector<1x256xf32>
    %c61 = arith.constant 61 : index
    %289 = memref.load %arg8[%c61] : memref<98xf32, #tpu.memory_space<smem>>
    %290 = vector.broadcast %289 : f32 to vector<1x256xf32>
    %291 = arith.mulf %290, %175 : vector<1x256xf32>
    %292 = arith.addf %288, %291 : vector<1x256xf32>
    %c13 = arith.constant 13 : index
    %293 = memref.load %arg8[%c13] : memref<98xf32, #tpu.memory_space<smem>>
    %294 = vector.broadcast %293 : f32 to vector<1x256xf32>
    %295 = arith.mulf %294, %178 : vector<1x256xf32>
    %296 = arith.addf %292, %295 : vector<1x256xf32>
    %c62 = arith.constant 62 : index
    %297 = memref.load %arg8[%c62] : memref<98xf32, #tpu.memory_space<smem>>
    %298 = vector.broadcast %297 : f32 to vector<1x256xf32>
    %299 = arith.mulf %298, %181 : vector<1x256xf32>
    %300 = arith.addf %296, %299 : vector<1x256xf32>
    %c32_i32 = arith.constant 32 : i32
    %301 = tpu.dynamic_rotate %300 by %c32_i32 dim 1 : vector<1x256xf32>, i32 -> vector<1x256xf32>
    %cst_90 = arith.constant 0.000000e+00 : f32
    %302 = vector.broadcast %cst_90 : f32 to vector<1x256xf32>
    %303 = arith.select %41, %301, %302 : vector<1x256xi1>, vector<1x256xf32>
    %304 = arith.addf %243, %303 : vector<1x256xf32>
    %cst_91 = arith.constant 0.000000e+00 : f32
    %305 = vector.broadcast %cst_91 : f32 to vector<1x256xf32>
    %c14 = arith.constant 14 : index
    %306 = memref.load %arg8[%c14] : memref<98xf32, #tpu.memory_space<smem>>
    %307 = vector.broadcast %306 : f32 to vector<1x256xf32>
    %308 = arith.mulf %307, %148 : vector<1x256xf32>
    %309 = arith.addf %305, %308 : vector<1x256xf32>
    %c63 = arith.constant 63 : index
    %310 = memref.load %arg8[%c63] : memref<98xf32, #tpu.memory_space<smem>>
    %311 = vector.broadcast %310 : f32 to vector<1x256xf32>
    %312 = arith.mulf %311, %151 : vector<1x256xf32>
    %313 = arith.addf %309, %312 : vector<1x256xf32>
    %c15 = arith.constant 15 : index
    %314 = memref.load %arg8[%c15] : memref<98xf32, #tpu.memory_space<smem>>
    %315 = vector.broadcast %314 : f32 to vector<1x256xf32>
    %316 = arith.mulf %315, %154 : vector<1x256xf32>
    %317 = arith.addf %313, %316 : vector<1x256xf32>
    %c64 = arith.constant 64 : index
    %318 = memref.load %arg8[%c64] : memref<98xf32, #tpu.memory_space<smem>>
    %319 = vector.broadcast %318 : f32 to vector<1x256xf32>
    %320 = arith.mulf %319, %157 : vector<1x256xf32>
    %321 = arith.addf %317, %320 : vector<1x256xf32>
    %c16 = arith.constant 16 : index
    %322 = memref.load %arg8[%c16] : memref<98xf32, #tpu.memory_space<smem>>
    %323 = vector.broadcast %322 : f32 to vector<1x256xf32>
    %324 = arith.mulf %323, %160 : vector<1x256xf32>
    %325 = arith.addf %321, %324 : vector<1x256xf32>
    %c65 = arith.constant 65 : index
    %326 = memref.load %arg8[%c65] : memref<98xf32, #tpu.memory_space<smem>>
    %327 = vector.broadcast %326 : f32 to vector<1x256xf32>
    %328 = arith.mulf %327, %163 : vector<1x256xf32>
    %329 = arith.addf %325, %328 : vector<1x256xf32>
    %c17 = arith.constant 17 : index
    %330 = memref.load %arg8[%c17] : memref<98xf32, #tpu.memory_space<smem>>
    %331 = vector.broadcast %330 : f32 to vector<1x256xf32>
    %332 = arith.mulf %331, %143 : vector<1x256xf32>
    %333 = arith.addf %329, %332 : vector<1x256xf32>
    %c66 = arith.constant 66 : index
    %334 = memref.load %arg8[%c66] : memref<98xf32, #tpu.memory_space<smem>>
    %335 = vector.broadcast %334 : f32 to vector<1x256xf32>
    %336 = arith.mulf %335, %145 : vector<1x256xf32>
    %337 = arith.addf %333, %336 : vector<1x256xf32>
    %c18 = arith.constant 18 : index
    %338 = memref.load %arg8[%c18] : memref<98xf32, #tpu.memory_space<smem>>
    %339 = vector.broadcast %338 : f32 to vector<1x256xf32>
    %340 = arith.mulf %339, %166 : vector<1x256xf32>
    %341 = arith.addf %337, %340 : vector<1x256xf32>
    %c67 = arith.constant 67 : index
    %342 = memref.load %arg8[%c67] : memref<98xf32, #tpu.memory_space<smem>>
    %343 = vector.broadcast %342 : f32 to vector<1x256xf32>
    %344 = arith.mulf %343, %169 : vector<1x256xf32>
    %345 = arith.addf %341, %344 : vector<1x256xf32>
    %c19 = arith.constant 19 : index
    %346 = memref.load %arg8[%c19] : memref<98xf32, #tpu.memory_space<smem>>
    %347 = vector.broadcast %346 : f32 to vector<1x256xf32>
    %348 = arith.mulf %347, %172 : vector<1x256xf32>
    %349 = arith.addf %345, %348 : vector<1x256xf32>
    %c68 = arith.constant 68 : index
    %350 = memref.load %arg8[%c68] : memref<98xf32, #tpu.memory_space<smem>>
    %351 = vector.broadcast %350 : f32 to vector<1x256xf32>
    %352 = arith.mulf %351, %175 : vector<1x256xf32>
    %353 = arith.addf %349, %352 : vector<1x256xf32>
    %c20 = arith.constant 20 : index
    %354 = memref.load %arg8[%c20] : memref<98xf32, #tpu.memory_space<smem>>
    %355 = vector.broadcast %354 : f32 to vector<1x256xf32>
    %356 = arith.mulf %355, %178 : vector<1x256xf32>
    %357 = arith.addf %353, %356 : vector<1x256xf32>
    %c69 = arith.constant 69 : index
    %358 = memref.load %arg8[%c69] : memref<98xf32, #tpu.memory_space<smem>>
    %359 = vector.broadcast %358 : f32 to vector<1x256xf32>
    %360 = arith.mulf %359, %181 : vector<1x256xf32>
    %361 = arith.addf %357, %360 : vector<1x256xf32>
    %c16_i32_92 = arith.constant 16 : i32
    %362 = tpu.dynamic_rotate %361 by %c16_i32_92 dim 1 : vector<1x256xf32>, i32 -> vector<1x256xf32>
    %cst_93 = arith.constant 0.000000e+00 : f32
    %363 = vector.broadcast %cst_93 : f32 to vector<1x256xf32>
    %364 = arith.select %59, %362, %363 : vector<1x256xi1>, vector<1x256xf32>
    %365 = arith.addf %304, %364 : vector<1x256xf32>
    %cst_94 = arith.constant 0.000000e+00 : f32
    %366 = vector.broadcast %cst_94 : f32 to vector<1x256xf32>
    %c21 = arith.constant 21 : index
    %367 = memref.load %arg8[%c21] : memref<98xf32, #tpu.memory_space<smem>>
    %368 = vector.broadcast %367 : f32 to vector<1x256xf32>
    %369 = arith.mulf %368, %148 : vector<1x256xf32>
    %370 = arith.addf %366, %369 : vector<1x256xf32>
    %c70 = arith.constant 70 : index
    %371 = memref.load %arg8[%c70] : memref<98xf32, #tpu.memory_space<smem>>
    %372 = vector.broadcast %371 : f32 to vector<1x256xf32>
    %373 = arith.mulf %372, %151 : vector<1x256xf32>
    %374 = arith.addf %370, %373 : vector<1x256xf32>
    %c22 = arith.constant 22 : index
    %375 = memref.load %arg8[%c22] : memref<98xf32, #tpu.memory_space<smem>>
    %376 = vector.broadcast %375 : f32 to vector<1x256xf32>
    %377 = arith.mulf %376, %154 : vector<1x256xf32>
    %378 = arith.addf %374, %377 : vector<1x256xf32>
    %c71 = arith.constant 71 : index
    %379 = memref.load %arg8[%c71] : memref<98xf32, #tpu.memory_space<smem>>
    %380 = vector.broadcast %379 : f32 to vector<1x256xf32>
    %381 = arith.mulf %380, %157 : vector<1x256xf32>
    %382 = arith.addf %378, %381 : vector<1x256xf32>
    %c23 = arith.constant 23 : index
    %383 = memref.load %arg8[%c23] : memref<98xf32, #tpu.memory_space<smem>>
    %384 = vector.broadcast %383 : f32 to vector<1x256xf32>
    %385 = arith.mulf %384, %160 : vector<1x256xf32>
    %386 = arith.addf %382, %385 : vector<1x256xf32>
    %c72 = arith.constant 72 : index
    %387 = memref.load %arg8[%c72] : memref<98xf32, #tpu.memory_space<smem>>
    %388 = vector.broadcast %387 : f32 to vector<1x256xf32>
    %389 = arith.mulf %388, %163 : vector<1x256xf32>
    %390 = arith.addf %386, %389 : vector<1x256xf32>
    %c24 = arith.constant 24 : index
    %391 = memref.load %arg8[%c24] : memref<98xf32, #tpu.memory_space<smem>>
    %392 = vector.broadcast %391 : f32 to vector<1x256xf32>
    %393 = arith.mulf %392, %143 : vector<1x256xf32>
    %394 = arith.addf %390, %393 : vector<1x256xf32>
    %c73 = arith.constant 73 : index
    %395 = memref.load %arg8[%c73] : memref<98xf32, #tpu.memory_space<smem>>
    %396 = vector.broadcast %395 : f32 to vector<1x256xf32>
    %397 = arith.mulf %396, %145 : vector<1x256xf32>
    %398 = arith.addf %394, %397 : vector<1x256xf32>
    %c25 = arith.constant 25 : index
    %399 = memref.load %arg8[%c25] : memref<98xf32, #tpu.memory_space<smem>>
    %400 = vector.broadcast %399 : f32 to vector<1x256xf32>
    %401 = arith.mulf %400, %166 : vector<1x256xf32>
    %402 = arith.addf %398, %401 : vector<1x256xf32>
    %c74 = arith.constant 74 : index
    %403 = memref.load %arg8[%c74] : memref<98xf32, #tpu.memory_space<smem>>
    %404 = vector.broadcast %403 : f32 to vector<1x256xf32>
    %405 = arith.mulf %404, %169 : vector<1x256xf32>
    %406 = arith.addf %402, %405 : vector<1x256xf32>
    %c26 = arith.constant 26 : index
    %407 = memref.load %arg8[%c26] : memref<98xf32, #tpu.memory_space<smem>>
    %408 = vector.broadcast %407 : f32 to vector<1x256xf32>
    %409 = arith.mulf %408, %172 : vector<1x256xf32>
    %410 = arith.addf %406, %409 : vector<1x256xf32>
    %c75 = arith.constant 75 : index
    %411 = memref.load %arg8[%c75] : memref<98xf32, #tpu.memory_space<smem>>
    %412 = vector.broadcast %411 : f32 to vector<1x256xf32>
    %413 = arith.mulf %412, %175 : vector<1x256xf32>
    %414 = arith.addf %410, %413 : vector<1x256xf32>
    %c27 = arith.constant 27 : index
    %415 = memref.load %arg8[%c27] : memref<98xf32, #tpu.memory_space<smem>>
    %416 = vector.broadcast %415 : f32 to vector<1x256xf32>
    %417 = arith.mulf %416, %178 : vector<1x256xf32>
    %418 = arith.addf %414, %417 : vector<1x256xf32>
    %c76 = arith.constant 76 : index
    %419 = memref.load %arg8[%c76] : memref<98xf32, #tpu.memory_space<smem>>
    %420 = vector.broadcast %419 : f32 to vector<1x256xf32>
    %421 = arith.mulf %420, %181 : vector<1x256xf32>
    %422 = arith.addf %418, %421 : vector<1x256xf32>
    %423 = arith.addf %365, %422 : vector<1x256xf32>
    %cst_95 = arith.constant 0.000000e+00 : f32
    %424 = vector.broadcast %cst_95 : f32 to vector<1x256xf32>
    %c28 = arith.constant 28 : index
    %425 = memref.load %arg8[%c28] : memref<98xf32, #tpu.memory_space<smem>>
    %426 = vector.broadcast %425 : f32 to vector<1x256xf32>
    %427 = arith.mulf %426, %148 : vector<1x256xf32>
    %428 = arith.addf %424, %427 : vector<1x256xf32>
    %c77 = arith.constant 77 : index
    %429 = memref.load %arg8[%c77] : memref<98xf32, #tpu.memory_space<smem>>
    %430 = vector.broadcast %429 : f32 to vector<1x256xf32>
    %431 = arith.mulf %430, %151 : vector<1x256xf32>
    %432 = arith.addf %428, %431 : vector<1x256xf32>
    %c29 = arith.constant 29 : index
    %433 = memref.load %arg8[%c29] : memref<98xf32, #tpu.memory_space<smem>>
    %434 = vector.broadcast %433 : f32 to vector<1x256xf32>
    %435 = arith.mulf %434, %154 : vector<1x256xf32>
    %436 = arith.addf %432, %435 : vector<1x256xf32>
    %c78 = arith.constant 78 : index
    %437 = memref.load %arg8[%c78] : memref<98xf32, #tpu.memory_space<smem>>
    %438 = vector.broadcast %437 : f32 to vector<1x256xf32>
    %439 = arith.mulf %438, %157 : vector<1x256xf32>
    %440 = arith.addf %436, %439 : vector<1x256xf32>
    %c30 = arith.constant 30 : index
    %441 = memref.load %arg8[%c30] : memref<98xf32, #tpu.memory_space<smem>>
    %442 = vector.broadcast %441 : f32 to vector<1x256xf32>
    %443 = arith.mulf %442, %160 : vector<1x256xf32>
    %444 = arith.addf %440, %443 : vector<1x256xf32>
    %c79 = arith.constant 79 : index
    %445 = memref.load %arg8[%c79] : memref<98xf32, #tpu.memory_space<smem>>
    %446 = vector.broadcast %445 : f32 to vector<1x256xf32>
    %447 = arith.mulf %446, %163 : vector<1x256xf32>
    %448 = arith.addf %444, %447 : vector<1x256xf32>
    %c31 = arith.constant 31 : index
    %449 = memref.load %arg8[%c31] : memref<98xf32, #tpu.memory_space<smem>>
    %450 = vector.broadcast %449 : f32 to vector<1x256xf32>
    %451 = arith.mulf %450, %143 : vector<1x256xf32>
    %452 = arith.addf %448, %451 : vector<1x256xf32>
    %c80 = arith.constant 80 : index
    %453 = memref.load %arg8[%c80] : memref<98xf32, #tpu.memory_space<smem>>
    %454 = vector.broadcast %453 : f32 to vector<1x256xf32>
    %455 = arith.mulf %454, %145 : vector<1x256xf32>
    %456 = arith.addf %452, %455 : vector<1x256xf32>
    %c32 = arith.constant 32 : index
    %457 = memref.load %arg8[%c32] : memref<98xf32, #tpu.memory_space<smem>>
    %458 = vector.broadcast %457 : f32 to vector<1x256xf32>
    %459 = arith.mulf %458, %166 : vector<1x256xf32>
    %460 = arith.addf %456, %459 : vector<1x256xf32>
    %c81 = arith.constant 81 : index
    %461 = memref.load %arg8[%c81] : memref<98xf32, #tpu.memory_space<smem>>
    %462 = vector.broadcast %461 : f32 to vector<1x256xf32>
    %463 = arith.mulf %462, %169 : vector<1x256xf32>
    %464 = arith.addf %460, %463 : vector<1x256xf32>
    %c33 = arith.constant 33 : index
    %465 = memref.load %arg8[%c33] : memref<98xf32, #tpu.memory_space<smem>>
    %466 = vector.broadcast %465 : f32 to vector<1x256xf32>
    %467 = arith.mulf %466, %172 : vector<1x256xf32>
    %468 = arith.addf %464, %467 : vector<1x256xf32>
    %c82 = arith.constant 82 : index
    %469 = memref.load %arg8[%c82] : memref<98xf32, #tpu.memory_space<smem>>
    %470 = vector.broadcast %469 : f32 to vector<1x256xf32>
    %471 = arith.mulf %470, %175 : vector<1x256xf32>
    %472 = arith.addf %468, %471 : vector<1x256xf32>
    %c34 = arith.constant 34 : index
    %473 = memref.load %arg8[%c34] : memref<98xf32, #tpu.memory_space<smem>>
    %474 = vector.broadcast %473 : f32 to vector<1x256xf32>
    %475 = arith.mulf %474, %178 : vector<1x256xf32>
    %476 = arith.addf %472, %475 : vector<1x256xf32>
    %c83 = arith.constant 83 : index
    %477 = memref.load %arg8[%c83] : memref<98xf32, #tpu.memory_space<smem>>
    %478 = vector.broadcast %477 : f32 to vector<1x256xf32>
    %479 = arith.mulf %478, %181 : vector<1x256xf32>
    %480 = arith.addf %476, %479 : vector<1x256xf32>
    %c240_i32 = arith.constant 240 : i32
    %481 = tpu.dynamic_rotate %480 by %c240_i32 dim 1 : vector<1x256xf32>, i32 -> vector<1x256xf32>
    %cst_96 = arith.constant 0.000000e+00 : f32
    %482 = vector.broadcast %cst_96 : f32 to vector<1x256xf32>
    %483 = arith.select %77, %481, %482 : vector<1x256xi1>, vector<1x256xf32>
    %484 = arith.addf %423, %483 : vector<1x256xf32>
    %cst_97 = arith.constant 0.000000e+00 : f32
    %485 = vector.broadcast %cst_97 : f32 to vector<1x256xf32>
    %c35 = arith.constant 35 : index
    %486 = memref.load %arg8[%c35] : memref<98xf32, #tpu.memory_space<smem>>
    %487 = vector.broadcast %486 : f32 to vector<1x256xf32>
    %488 = arith.mulf %487, %148 : vector<1x256xf32>
    %489 = arith.addf %485, %488 : vector<1x256xf32>
    %c84 = arith.constant 84 : index
    %490 = memref.load %arg8[%c84] : memref<98xf32, #tpu.memory_space<smem>>
    %491 = vector.broadcast %490 : f32 to vector<1x256xf32>
    %492 = arith.mulf %491, %151 : vector<1x256xf32>
    %493 = arith.addf %489, %492 : vector<1x256xf32>
    %c36 = arith.constant 36 : index
    %494 = memref.load %arg8[%c36] : memref<98xf32, #tpu.memory_space<smem>>
    %495 = vector.broadcast %494 : f32 to vector<1x256xf32>
    %496 = arith.mulf %495, %154 : vector<1x256xf32>
    %497 = arith.addf %493, %496 : vector<1x256xf32>
    %c85 = arith.constant 85 : index
    %498 = memref.load %arg8[%c85] : memref<98xf32, #tpu.memory_space<smem>>
    %499 = vector.broadcast %498 : f32 to vector<1x256xf32>
    %500 = arith.mulf %499, %157 : vector<1x256xf32>
    %501 = arith.addf %497, %500 : vector<1x256xf32>
    %c37 = arith.constant 37 : index
    %502 = memref.load %arg8[%c37] : memref<98xf32, #tpu.memory_space<smem>>
    %503 = vector.broadcast %502 : f32 to vector<1x256xf32>
    %504 = arith.mulf %503, %160 : vector<1x256xf32>
    %505 = arith.addf %501, %504 : vector<1x256xf32>
    %c86 = arith.constant 86 : index
    %506 = memref.load %arg8[%c86] : memref<98xf32, #tpu.memory_space<smem>>
    %507 = vector.broadcast %506 : f32 to vector<1x256xf32>
    %508 = arith.mulf %507, %163 : vector<1x256xf32>
    %509 = arith.addf %505, %508 : vector<1x256xf32>
    %c38 = arith.constant 38 : index
    %510 = memref.load %arg8[%c38] : memref<98xf32, #tpu.memory_space<smem>>
    %511 = vector.broadcast %510 : f32 to vector<1x256xf32>
    %512 = arith.mulf %511, %143 : vector<1x256xf32>
    %513 = arith.addf %509, %512 : vector<1x256xf32>
    %c87 = arith.constant 87 : index
    %514 = memref.load %arg8[%c87] : memref<98xf32, #tpu.memory_space<smem>>
    %515 = vector.broadcast %514 : f32 to vector<1x256xf32>
    %516 = arith.mulf %515, %145 : vector<1x256xf32>
    %517 = arith.addf %513, %516 : vector<1x256xf32>
    %c39 = arith.constant 39 : index
    %518 = memref.load %arg8[%c39] : memref<98xf32, #tpu.memory_space<smem>>
    %519 = vector.broadcast %518 : f32 to vector<1x256xf32>
    %520 = arith.mulf %519, %166 : vector<1x256xf32>
    %521 = arith.addf %517, %520 : vector<1x256xf32>
    %c88 = arith.constant 88 : index
    %522 = memref.load %arg8[%c88] : memref<98xf32, #tpu.memory_space<smem>>
    %523 = vector.broadcast %522 : f32 to vector<1x256xf32>
    %524 = arith.mulf %523, %169 : vector<1x256xf32>
    %525 = arith.addf %521, %524 : vector<1x256xf32>
    %c40 = arith.constant 40 : index
    %526 = memref.load %arg8[%c40] : memref<98xf32, #tpu.memory_space<smem>>
    %527 = vector.broadcast %526 : f32 to vector<1x256xf32>
    %528 = arith.mulf %527, %172 : vector<1x256xf32>
    %529 = arith.addf %525, %528 : vector<1x256xf32>
    %c89 = arith.constant 89 : index
    %530 = memref.load %arg8[%c89] : memref<98xf32, #tpu.memory_space<smem>>
    %531 = vector.broadcast %530 : f32 to vector<1x256xf32>
    %532 = arith.mulf %531, %175 : vector<1x256xf32>
    %533 = arith.addf %529, %532 : vector<1x256xf32>
    %c41 = arith.constant 41 : index
    %534 = memref.load %arg8[%c41] : memref<98xf32, #tpu.memory_space<smem>>
    %535 = vector.broadcast %534 : f32 to vector<1x256xf32>
    %536 = arith.mulf %535, %178 : vector<1x256xf32>
    %537 = arith.addf %533, %536 : vector<1x256xf32>
    %c90 = arith.constant 90 : index
    %538 = memref.load %arg8[%c90] : memref<98xf32, #tpu.memory_space<smem>>
    %539 = vector.broadcast %538 : f32 to vector<1x256xf32>
    %540 = arith.mulf %539, %181 : vector<1x256xf32>
    %541 = arith.addf %537, %540 : vector<1x256xf32>
    %c224_i32 = arith.constant 224 : i32
    %542 = tpu.dynamic_rotate %541 by %c224_i32 dim 1 : vector<1x256xf32>, i32 -> vector<1x256xf32>
    %cst_98 = arith.constant 0.000000e+00 : f32
    %543 = vector.broadcast %cst_98 : f32 to vector<1x256xf32>
    %544 = arith.select %95, %542, %543 : vector<1x256xi1>, vector<1x256xf32>
    %545 = arith.addf %484, %544 : vector<1x256xf32>
    %cst_99 = arith.constant 0.000000e+00 : f32
    %546 = vector.broadcast %cst_99 : f32 to vector<1x256xf32>
    %c42 = arith.constant 42 : index
    %547 = memref.load %arg8[%c42] : memref<98xf32, #tpu.memory_space<smem>>
    %548 = vector.broadcast %547 : f32 to vector<1x256xf32>
    %549 = arith.mulf %548, %148 : vector<1x256xf32>
    %550 = arith.addf %546, %549 : vector<1x256xf32>
    %c91 = arith.constant 91 : index
    %551 = memref.load %arg8[%c91] : memref<98xf32, #tpu.memory_space<smem>>
    %552 = vector.broadcast %551 : f32 to vector<1x256xf32>
    %553 = arith.mulf %552, %151 : vector<1x256xf32>
    %554 = arith.addf %550, %553 : vector<1x256xf32>
    %c43 = arith.constant 43 : index
    %555 = memref.load %arg8[%c43] : memref<98xf32, #tpu.memory_space<smem>>
    %556 = vector.broadcast %555 : f32 to vector<1x256xf32>
    %557 = arith.mulf %556, %154 : vector<1x256xf32>
    %558 = arith.addf %554, %557 : vector<1x256xf32>
    %c92 = arith.constant 92 : index
    %559 = memref.load %arg8[%c92] : memref<98xf32, #tpu.memory_space<smem>>
    %560 = vector.broadcast %559 : f32 to vector<1x256xf32>
    %561 = arith.mulf %560, %157 : vector<1x256xf32>
    %562 = arith.addf %558, %561 : vector<1x256xf32>
    %c44 = arith.constant 44 : index
    %563 = memref.load %arg8[%c44] : memref<98xf32, #tpu.memory_space<smem>>
    %564 = vector.broadcast %563 : f32 to vector<1x256xf32>
    %565 = arith.mulf %564, %160 : vector<1x256xf32>
    %566 = arith.addf %562, %565 : vector<1x256xf32>
    %c93 = arith.constant 93 : index
    %567 = memref.load %arg8[%c93] : memref<98xf32, #tpu.memory_space<smem>>
    %568 = vector.broadcast %567 : f32 to vector<1x256xf32>
    %569 = arith.mulf %568, %163 : vector<1x256xf32>
    %570 = arith.addf %566, %569 : vector<1x256xf32>
    %c45 = arith.constant 45 : index
    %571 = memref.load %arg8[%c45] : memref<98xf32, #tpu.memory_space<smem>>
    %572 = vector.broadcast %571 : f32 to vector<1x256xf32>
    %573 = arith.mulf %572, %143 : vector<1x256xf32>
    %574 = arith.addf %570, %573 : vector<1x256xf32>
    %c94 = arith.constant 94 : index
    %575 = memref.load %arg8[%c94] : memref<98xf32, #tpu.memory_space<smem>>
    %576 = vector.broadcast %575 : f32 to vector<1x256xf32>
    %577 = arith.mulf %576, %145 : vector<1x256xf32>
    %578 = arith.addf %574, %577 : vector<1x256xf32>
    %c46 = arith.constant 46 : index
    %579 = memref.load %arg8[%c46] : memref<98xf32, #tpu.memory_space<smem>>
    %580 = vector.broadcast %579 : f32 to vector<1x256xf32>
    %581 = arith.mulf %580, %166 : vector<1x256xf32>
    %582 = arith.addf %578, %581 : vector<1x256xf32>
    %c95 = arith.constant 95 : index
    %583 = memref.load %arg8[%c95] : memref<98xf32, #tpu.memory_space<smem>>
    %584 = vector.broadcast %583 : f32 to vector<1x256xf32>
    %585 = arith.mulf %584, %169 : vector<1x256xf32>
    %586 = arith.addf %582, %585 : vector<1x256xf32>
    %c47 = arith.constant 47 : index
    %587 = memref.load %arg8[%c47] : memref<98xf32, #tpu.memory_space<smem>>
    %588 = vector.broadcast %587 : f32 to vector<1x256xf32>
    %589 = arith.mulf %588, %172 : vector<1x256xf32>
    %590 = arith.addf %586, %589 : vector<1x256xf32>
    %c96 = arith.constant 96 : index
    %591 = memref.load %arg8[%c96] : memref<98xf32, #tpu.memory_space<smem>>
    %592 = vector.broadcast %591 : f32 to vector<1x256xf32>
    %593 = arith.mulf %592, %175 : vector<1x256xf32>
    %594 = arith.addf %590, %593 : vector<1x256xf32>
    %c48 = arith.constant 48 : index
    %595 = memref.load %arg8[%c48] : memref<98xf32, #tpu.memory_space<smem>>
    %596 = vector.broadcast %595 : f32 to vector<1x256xf32>
    %597 = arith.mulf %596, %178 : vector<1x256xf32>
    %598 = arith.addf %594, %597 : vector<1x256xf32>
    %c97 = arith.constant 97 : index
    %599 = memref.load %arg8[%c97] : memref<98xf32, #tpu.memory_space<smem>>
    %600 = vector.broadcast %599 : f32 to vector<1x256xf32>
    %601 = arith.mulf %600, %181 : vector<1x256xf32>
    %602 = arith.addf %598, %601 : vector<1x256xf32>
    %c208_i32 = arith.constant 208 : i32
    %603 = tpu.dynamic_rotate %602 by %c208_i32 dim 1 : vector<1x256xf32>, i32 -> vector<1x256xf32>
    %cst_100 = arith.constant 0.000000e+00 : f32
    %604 = vector.broadcast %cst_100 : f32 to vector<1x256xf32>
    %605 = arith.select %113, %603, %604 : vector<1x256xi1>, vector<1x256xf32>
    %606 = arith.addf %545, %605 : vector<1x256xf32>
    %c0_101 = arith.constant 0 : index
    %607 = memref.load %arg9[%c0_101] : memref<1xf32, #tpu.memory_space<smem>>
    %608 = vector.broadcast %607 : f32 to vector<1x256xf32>
    %609 = arith.addf %606, %608 : vector<1x256xf32>
    %610 = arith.negf %609 : vector<1x256xf32>
    %611 = math.exp %610 : vector<1x256xf32>
    %cst_102 = arith.constant 1.000000e+00 : f32
    %612 = vector.broadcast %cst_102 : f32 to vector<1x256xf32>
    %613 = arith.addf %612, %611 : vector<1x256xf32>
    %614 = arith.divf %612, %613 : vector<1x256xf32>
    %615 = vector.broadcast %614 : vector<1x256xf32> to vector<8x256xf32>
    %616 = arith.mulf %139, %615 : vector<8x256xf32>
    %c0_103 = arith.constant 0 : index
    %c0_104 = arith.constant 0 : index
    %c0_105 = arith.constant 0 : index
    %617 = vector.load %arg10[%c0_103, %c0_104, %c0_105] : memref<1x8x256xf32, #tpu.memory_space<vmem>>, vector<1x8x256xf32>
    %618 = vector.shape_cast %617 : vector<1x8x256xf32> to vector<8x256xf32>
    %619 = vector.shape_cast %616 : vector<8x256xf32> to vector<1x8x256xf32>
    tpu.vector_store %arg10[%c0_103, %c0_104, %c0_105], %619 {strides = array<i32>} : memref<1x8x256xf32, #tpu.memory_space<vmem>>, vector<1x8x256xf32>,
    return
  }
  func.func @transform_0(%arg0: i32) -> (i32, i32, i32) {
    %c0_i32 = arith.constant 0 : i32
    %c0_i32_0 = arith.constant 0 : i32
    %c0_i32_1 = arith.constant 0 : i32
    return %arg0, %c0_i32, %c0_i32_0 : i32, i32, i32
  }
  func.func @transform_1(%arg0: i32) -> (i32, i32) {
    %c0_i32 = arith.constant 0 : i32
    %c0_i32_0 = arith.constant 0 : i32
    %c0_i32_1 = arith.constant 0 : i32
    return %c0_i32, %c0_i32_0 : i32, i32
  }
  func.func @transform_2(%arg0: i32) -> (i32, i32) {
    %c0_i32 = arith.constant 0 : i32
    %c0_i32_0 = arith.constant 0 : i32
    %c0_i32_1 = arith.constant 0 : i32
    return %c0_i32, %c0_i32_0 : i32, i32
  }
  func.func @transform_3(%arg0: i32) -> (i32, i32) {
    %c0_i32 = arith.constant 0 : i32
    %c0_i32_0 = arith.constant 0 : i32
    %c0_i32_1 = arith.constant 0 : i32
    return %c0_i32, %c0_i32_0 : i32, i32
  }
  func.func @transform_4(%arg0: i32) -> (i32, i32) {
    %c0_i32 = arith.constant 0 : i32
    %c0_i32_0 = arith.constant 0 : i32
    %c0_i32_1 = arith.constant 0 : i32
    return %c0_i32, %c0_i32_0 : i32, i32
  }
  func.func @transform_5(%arg0: i32) -> (i32, i32) {
    %c0_i32 = arith.constant 0 : i32
    %c0_i32_0 = arith.constant 0 : i32
    %c0_i32_1 = arith.constant 0 : i32
    return %c0_i32, %c0_i32_0 : i32, i32
  }
  func.func @transform_6(%arg0: i32) -> (i32, i32) {
    %c0_i32 = arith.constant 0 : i32
    %c0_i32_0 = arith.constant 0 : i32
    %c0_i32_1 = arith.constant 0 : i32
    return %c0_i32, %c0_i32_0 : i32, i32
  }
  func.func @transform_7(%arg0: i32) -> i32 {
    %c0_i32 = arith.constant 0 : i32
    %c0_i32_0 = arith.constant 0 : i32
    return %c0_i32 : i32
  }
  func.func @transform_8(%arg0: i32) -> i32 {
    %c0_i32 = arith.constant 0 : i32
    %c0_i32_0 = arith.constant 0 : i32
    return %c0_i32 : i32
  }
  func.func @transform_9(%arg0: i32) -> (i32, i32, i32) {
    %c0_i32 = arith.constant 0 : i32
    %c0_i32_0 = arith.constant 0 : i32
    %c0_i32_1 = arith.constant 0 : i32
    return %arg0, %c0_i32, %c0_i32_0 : i32, i32, i32
  }
}

</mosaic_0001>

<llo_original>
// kernel: tpu_custom_call.1
$region0: #{tpu_custom_call.1}
  #allocation0 [shape = 'u32[]', space=smem, size = 0x4, offset = 0x4, fixed_abs, tag = 'smem constant byte address 0x4 - core index']
  #allocation1 [shape = 'u32[144,128]{1,0:T(1,128)}', space=vmem, size = 0x12000, scoped, tag = 'internal scratch']
  #allocation2 [shape = 'f32[1]{0:T(128)S(6)}', space=smem, size = 0x200, scoped, tag = 'scoped memory for tpu_custom_call.1']
  %s0 = inlined_call_operand.hbm [shape: f32[2,8,256], index: 0, kind: input, shape index: {}]
  %s1 = inlined_call_operand.vmem [shape: s32[1,256], index: 1, kind: input, shape index: {}]
  %s2 = inlined_call_operand.vmem [shape: s32[1,256], index: 2, kind: input, shape index: {}]
  %s3 = inlined_call_operand.vmem [shape: f32[4,8], index: 3, kind: input, shape index: {}]
  %s4 = inlined_call_operand.vmem [shape: f32[4,1], index: 4, kind: input, shape index: {}]
  %s5 = inlined_call_operand.vmem [shape: f32[8,4], index: 5, kind: input, shape index: {}]
  %s6 = inlined_call_operand.vmem [shape: f32[8,1], index: 6, kind: input, shape index: {}]
  %s7 = inlined_call_operand.vmem [shape: f32[98], index: 7, kind: input, shape index: {}]
  %s8 = inlined_call_operand.<no memory space> [shape: f32[1], index: 8, kind: input, shape index: {}]
  %s9 = inlined_call_operand.hbm [shape: f32[2,8,256], index: 9, kind: output, shape index: {}]
  %s10 = sld [smem:[#allocation0]]
  $region77: #{tpu_custom_call.1} parent=0
    _
  %s12 = ssub.s32 1, %s10
  %s13 = scalar_select 0, %s12, %s10
  %14 = sst [smem:[#allocation2]] %s8
  $region1: #{tpu_custom_call.1} parent=0
    #allocation3 [shape = 'u8[16384]{0}', space=vmem, size = 0x4000, scoped, tag = 'input window, operand 0']
    #allocation4 [shape = 's32[2]{0}', space=sflag, size = 0x8, scoped, tag = 'scoped memory for tpu_custom_call.1']
    #allocation5 [shape = 's32[2]{0}', space=sflag, size = 0x8, scoped, tag = 'scoped memory for tpu_custom_call.1']
    #allocation6 [shape = 's32[2]{0}', space=sflag, size = 0x8, scoped, tag = 'scoped memory for tpu_custom_call.1']
    #allocation7 [shape = 'u8[512]{0}', space=smem, size = 0x200, scoped, tag = 'input window, operand 7, single buffered']
    #allocation8 [shape = 'u8[16384]{0}', space=vmem, size = 0x4000, scoped, tag = 'output window, operand 0']
    %15 = vsyncpa [#allocation4], 0
    %s16 = scalar_lea.sflag [#allocation4], 1
    %17 = vsyncpa %s16, 0
    %18 = vsyncpa [#allocation6], 0
    %19 = vsyncpa [#allocation5], 0
    %s20 = scalar_lea.sflag [#allocation5], 1
    %21 = vsyncpa %s20, 0
    loop: start=0, step=1, limit=4
    $region2: #{tpu_custom_call.1} parent=1 // loop_pre_header
      _
    $region3: #{tpu_custom_call.1} parent=1 // loop_header
      %s23 = sphi 0, %s27
      %p24 = scmp.ge.s32.totalorder %s23, 4
      %s33 = sphi 0, %s35
      %s36 = sphi 0, %s33
      %s37 = sphi 0, %s36
      %s53 = sphi 0, %s37
      %s57 = sphi 0, %s57
      %s59 = sphi 0, %s57
      %s60 = sphi 0, %s59
      %s74 = sphi 0, %s60
      %s78 = sphi 0, %s78
      %s80 = sphi 0, %s78
      %s81 = sphi 0, %s80
      %s95 = sphi 0, %s81
      %s99 = sphi 0, %s99
      %s101 = sphi 0, %s99
      %s102 = sphi 0, %s101
      %s116 = sphi 0, %s102
      %s120 = sphi 0, %s120
      %s122 = sphi 0, %s120
      %s123 = sphi 0, %s122
      %s137 = sphi 0, %s123
      %s141 = sphi 0, %s141
      %s143 = sphi 0, %s141
      %s144 = sphi 0, %s143
      %s158 = sphi 0, %s144
      %s162 = sphi 0, %s162
      %s164 = sphi 0, %s162
      %s165 = sphi 0, %s164
      %s179 = sphi 0, %s165
      %s183 = sphi 0, %s183
      %s185 = sphi 0, %s183
      %s186 = sphi 0, %s185
      %s200 = sphi 0, %s186
      %s204 = sphi 0, %s204
      %s206 = sphi 0, %s204
      %s207 = sphi 0, %s206
      %s221 = sphi 0, %s207
      %s227 = sphi 0, %s229
      %s230 = sphi 0, %s227
      %s231 = sphi 0, %s230
      %s247 = sphi 0, %s231
    $region4: #{tpu_custom_call.1} parent=1 // loop_header_branch
      %26 = sbr.rel (%p24) target = $region8
    $region5: #{tpu_custom_call.1} parent=1 // loop_body
      %s28 = ssub.s32 %s23, 1
      %s29 = ssub.s32 %s23, 2
      %s30 = sadd.s32 %s23, 1
      %s31 = ssub.s32 %s23, %s30
      %p32 = scmp.eq.s32.totalorder %s31, 0
      %s34 = sadd.s32 %s33, 1
      %s35 = scalar_select %p32, %s33, %s34
      %p38 = pneg %p32
      %p39 = scmp.eq.s32.totalorder %s23, 1
      %p40 = por %p38, %p39
      %p41 = scmp.ne.s32.totalorder %s33, %s36
      %p42 = scmp.eq.s32.totalorder %s23, 0
      %p43 = por %p41, %p42
      %p44 = scmp.ne.s32.totalorder %s33, %s36
      %p45 = scmp.eq.s32.totalorder %s28, 1
      %p46 = por %p44, %p45
      %p47 = scmp.ne.s32.totalorder %s36, %s37
      %p48 = scmp.eq.s32.totalorder %s28, 0
      %p49 = por %p47, %p48
      %p50 = scmp.ne.s32.totalorder %s36, %s37
      %p51 = scmp.eq.s32.totalorder %s29, 1
      %p52 = por %p50, %p51
      %p54 = scmp.ne.s32.totalorder %s37, %s53
      %p55 = scmp.eq.s32.totalorder %s29, 0
      %p56 = por %p54, %p55
      %s58 = sadd.s32 %s57, 1
      %p61 = scmp.eq.s32.totalorder %s23, 1
      %p62 = scmp.ne.s32.totalorder %s57, %s59
      %p63 = scmp.eq.s32.totalorder %s23, 0
      %p64 = por %p62, %p63
      %p65 = scmp.ne.s32.totalorder %s57, %s59
      %p66 = scmp.eq.s32.totalorder %s28, 1
      %p67 = por %p65, %p66
      %p68 = scmp.ne.s32.totalorder %s59, %s60
      %p69 = scmp.eq.s32.totalorder %s28, 0
      %p70 = por %p68, %p69
      %p71 = scmp.ne.s32.totalorder %s59, %s60
      %p72 = scmp.eq.s32.totalorder %s29, 1
      %p73 = por %p71, %p72
      %p75 = scmp.ne.s32.totalorder %s60, %s74
      %p76 = scmp.eq.s32.totalorder %s29, 0
      %p77 = por %p75, %p76
      %s79 = sadd.s32 %s78, 1
      %p82 = scmp.eq.s32.totalorder %s23, 1
      %p83 = scmp.ne.s32.totalorder %s78, %s80
      %p84 = scmp.eq.s32.totalorder %s23, 0
      %p85 = por %p83, %p84
      %p86 = scmp.ne.s32.totalorder %s78, %s80
      %p87 = scmp.eq.s32.totalorder %s28, 1
      %p88 = por %p86, %p87
      %p89 = scmp.ne.s32.totalorder %s80, %s81
      %p90 = scmp.eq.s32.totalorder %s28, 0
      %p91 = por %p89, %p90
      %p92 = scmp.ne.s32.totalorder %s80, %s81
      %p93 = scmp.eq.s32.totalorder %s29, 1
      %p94 = por %p92, %p93
      %p96 = scmp.ne.s32.totalorder %s81, %s95
      %p97 = scmp.eq.s32.totalorder %s29, 0
      %p98 = por %p96, %p97
      %s100 = sadd.s32 %s99, 1
      %p103 = scmp.eq.s32.totalorder %s23, 1
      %p104 = scmp.ne.s32.totalorder %s99, %s101
      %p105 = scmp.eq.s32.totalorder %s23, 0
      %p106 = por %p104, %p105
      %p107 = scmp.ne.s32.totalorder %s99, %s101
      %p108 = scmp.eq.s32.totalorder %s28, 1
      %p109 = por %p107, %p108
      %p110 = scmp.ne.s32.totalorder %s101, %s102
      %p111 = scmp.eq.s32.totalorder %s28, 0
      %p112 = por %p110, %p111
      %p113 = scmp.ne.s32.totalorder %s101, %s102
      %p114 = scmp.eq.s32.totalorder %s29, 1
      %p115 = por %p113, %p114
      %p117 = scmp.ne.s32.totalorder %s102, %s116
      %p118 = scmp.eq.s32.totalorder %s29, 0
      %p119 = por %p117, %p118
      %s121 = sadd.s32 %s120, 1
      %p124 = scmp.eq.s32.totalorder %s23, 1
      %p125 = scmp.ne.s32.totalorder %s120, %s122
      %p126 = scmp.eq.s32.totalorder %s23, 0
      %p127 = por %p125, %p126
      %p128 = scmp.ne.s32.totalorder %s120, %s122
      %p129 = scmp.eq.s32.totalorder %s28, 1
      %p130 = por %p128, %p129
      %p131 = scmp.ne.s32.totalorder %s122, %s123
      %p132 = scmp.eq.s32.totalorder %s28, 0
      %p133 = por %p131, %p132
      %p134 = scmp.ne.s32.totalorder %s122, %s123
      %p135 = scmp.eq.s32.totalorder %s29, 1
      %p136 = por %p134, %p135
      %p138 = scmp.ne.s32.totalorder %s123, %s137
      %p139 = scmp.eq.s32.totalorder %s29, 0
      %p140 = por %p138, %p139
      %s142 = sadd.s32 %s141, 1
      %p145 = scmp.eq.s32.totalorder %s23, 1
      %p146 = scmp.ne.s32.totalorder %s141, %s143
      %p147 = scmp.eq.s32.totalorder %s23, 0
      %p148 = por %p146, %p147
      %p149 = scmp.ne.s32.totalorder %s141, %s143
      %p150 = scmp.eq.s32.totalorder %s28, 1
      %p151 = por %p149, %p150
      %p152 = scmp.ne.s32.totalorder %s143, %s144
      %p153 = scmp.eq.s32.totalorder %s28, 0
      %p154 = por %p152, %p153
      %p155 = scmp.ne.s32.totalorder %s143, %s144
      %p156 = scmp.eq.s32.totalorder %s29, 1
      %p157 = por %p155, %p156
      %p159 = scmp.ne.s32.totalorder %s144, %s158
      %p160 = scmp.eq.s32.totalorder %s29, 0
      %p161 = por %p159, %p160
      %s163 = sadd.s32 %s162, 1
      %p166 = scmp.eq.s32.totalorder %s23, 1
      %p167 = scmp.ne.s32.totalorder %s162, %s164
      %p168 = scmp.eq.s32.totalorder %s23, 0
      %p169 = por %p167, %p168
      %p170 = scmp.ne.s32.totalorder %s162, %s164
      %p171 = scmp.eq.s32.totalorder %s28, 1
      %p172 = por %p170, %p171
      %p173 = scmp.ne.s32.totalorder %s164, %s165
      %p174 = scmp.eq.s32.totalorder %s28, 0
      %p175 = por %p173, %p174
      %p176 = scmp.ne.s32.totalorder %s164, %s165
      %p177 = scmp.eq.s32.totalorder %s29, 1
      %p178 = por %p176, %p177
      %p180 = scmp.ne.s32.totalorder %s165, %s179
      %p181 = scmp.eq.s32.totalorder %s29, 0
      %p182 = por %p180, %p181
      %s184 = sadd.s32 %s183, 1
      %p187 = scmp.eq.s32.totalorder %s23, 1
      %p188 = scmp.ne.s32.totalorder %s183, %s185
      %p189 = scmp.eq.s32.totalorder %s23, 0
      %p190 = por %p188, %p189
      %p191 = scmp.ne.s32.totalorder %s183, %s185
      %p192 = scmp.eq.s32.totalorder %s28, 1
      %p193 = por %p191, %p192
      %p194 = scmp.ne.s32.totalorder %s185, %s186
      %p195 = scmp.eq.s32.totalorder %s28, 0
      %p196 = por %p194, %p195
      %p197 = scmp.ne.s32.totalorder %s185, %s186
      %p198 = scmp.eq.s32.totalorder %s29, 1
      %p199 = por %p197, %p198
      %p201 = scmp.ne.s32.totalorder %s186, %s200
      %p202 = scmp.eq.s32.totalorder %s29, 0
      %p203 = por %p201, %p202
      %s205 = sadd.s32 %s204, 1
      %p208 = scmp.eq.s32.totalorder %s23, 1
      %p209 = scmp.ne.s32.totalorder %s204, %s206
      %p210 = scmp.eq.s32.totalorder %s23, 0
      %p211 = por %p209, %p210
      %p212 = scmp.ne.s32.totalorder %s204, %s206
      %p213 = scmp.eq.s32.totalorder %s28, 1
      %p214 = por %p212, %p213
      %p215 = scmp.ne.s32.totalorder %s206, %s207
      %p216 = scmp.eq.s32.totalorder %s28, 0
      %p217 = por %p215, %p216
      %p218 = scmp.ne.s32.totalorder %s206, %s207
      %p219 = scmp.eq.s32.totalorder %s29, 1
      %p220 = por %p218, %p219
      %p222 = scmp.ne.s32.totalorder %s207, %s221
      %p223 = scmp.eq.s32.totalorder %s29, 0
      %p224 = por %p222, %p223
      %s225 = ssub.s32 %s23, %s30
      %p226 = scmp.eq.s32.totalorder %s225, 0
      %s228 = sadd.s32 %s227, 1
      %s229 = scalar_select %p226, %s227, %s228
      %p232 = pneg %p226
      %p233 = scmp.eq.s32.totalorder %s23, 1
      %p234 = por %p232, %p233
      %p235 = scmp.ne.s32.totalorder %s227, %s230
      %p236 = scmp.eq.s32.totalorder %s23, 0
      %p237 = por %p235, %p236
      %p238 = scmp.ne.s32.totalorder %s227, %s230
      %p239 = scmp.eq.s32.totalorder %s28, 1
      %p240 = por %p238, %p239
      %p241 = scmp.ne.s32.totalorder %s230, %s231
      %p242 = scmp.eq.s32.totalorder %s28, 0
      %p243 = por %p241, %p242
      %p244 = scmp.ne.s32.totalorder %s230, %s231
      %p245 = scmp.eq.s32.totalorder %s29, 1
      %p246 = por %p244, %p245
      %p248 = scmp.ne.s32.totalorder %s231, %s247
      %p249 = scmp.eq.s32.totalorder %s29, 0
      %p250 = por %p248, %p249
      %p251 = scmp.le.s32.totalorder 1, %s23
      %p252 = scmp.lt.s32.totalorder %s23, 3
      %p253 = pnand %p251, %p252
      %p254 = pneg %p253
      // Predicated region
      $region9: #{tpu_custom_call.1} parent=5 // pred_check
        _
      $region10: #{tpu_custom_call.1} parent=5 // pred_check_branch
        %256 = sbr.rel (%p253) target = $region12
      $region11: #{tpu_custom_call.1} parent=5 // pred_region
        %s257 = ssub.s32 %s23, 1
        // Predicated region
        $region13: #{tpu_custom_call.1} parent=11 // pred_check
          %p258 = pneg %p70
        $region14: #{tpu_custom_call.1} parent=11 // pred_check_branch
          %260 = sbr.rel (%p258) target = $region16
        $region15: #{tpu_custom_call.1} parent=11 // pred_region
          _
        $region16: #{tpu_custom_call.1} parent=11 // pred_fallthru
          _
        // Predicated region
        $region17: #{tpu_custom_call.1} parent=11 // pred_check
          %p261 = pneg %p91
        $region18: #{tpu_custom_call.1} parent=11 // pred_check_branch
          %263 = sbr.rel (%p261) target = $region20
        $region19: #{tpu_custom_call.1} parent=11 // pred_region
          _
        $region20: #{tpu_custom_call.1} parent=11 // pred_fallthru
          _
        // Predicated region
        $region21: #{tpu_custom_call.1} parent=11 // pred_check
          %p264 = pneg %p112
        $region22: #{tpu_custom_call.1} parent=11 // pred_check_branch
          %266 = sbr.rel (%p264) target = $region24
        $region23: #{tpu_custom_call.1} parent=11 // pred_region
          _
        $region24: #{tpu_custom_call.1} parent=11 // pred_fallthru
          _
        // Predicated region
        $region25: #{tpu_custom_call.1} parent=11 // pred_check
          %p267 = pneg %p133
        $region26: #{tpu_custom_call.1} parent=11 // pred_check_branch
          %269 = sbr.rel (%p267) target = $region28
        $region27: #{tpu_custom_call.1} parent=11 // pred_region
          _
        $region28: #{tpu_custom_call.1} parent=11 // pred_fallthru
          _
        // Predicated region
        $region29: #{tpu_custom_call.1} parent=11 // pred_check
          %p270 = pneg %p154
        $region30: #{tpu_custom_call.1} parent=11 // pred_check_branch
          %272 = sbr.rel (%p270) target = $region32
        $region31: #{tpu_custom_call.1} parent=11 // pred_region
          _
        $region32: #{tpu_custom_call.1} parent=11 // pred_fallthru
          _
        // Predicated region
        $region33: #{tpu_custom_call.1} parent=11 // pred_check
          %p273 = pneg %p175
        $region34: #{tpu_custom_call.1} parent=11 // pred_check_branch
          %275 = sbr.rel (%p273) target = $region36
        $region35: #{tpu_custom_call.1} parent=11 // pred_region
          _
        $region36: #{tpu_custom_call.1} parent=11 // pred_fallthru
          _
        // Predicated region
        $region37: #{tpu_custom_call.1} parent=11 // pred_check
          %p276 = pneg %p196
        $region38: #{tpu_custom_call.1} parent=11 // pred_check_branch
          %278 = sbr.rel (%p276) target = $region40
        $region39: #{tpu_custom_call.1} parent=11 // pred_region
          %s280 = ssub.s32 16, 16
          %281 = vsyncadd [#allocation6], %s280
          %s283 = sshll.u32 %s7, 4
          %s284 = int_to_ptr.vmem [resolvable:$true] %s283
          %286 = dma.vmem_to_smem %s284, 16, [#allocation7], [#allocation6]
        $region40: #{tpu_custom_call.1} parent=11 // pred_fallthru
          _
        // Predicated region
        $region41: #{tpu_custom_call.1} parent=11 // pred_check
          %p287 = pneg %p217
        $region42: #{tpu_custom_call.1} parent=11 // pred_check_branch
          %289 = sbr.rel (%p287) target = $region44
        $region43: #{tpu_custom_call.1} parent=11 // pred_region
          _
        $region44: #{tpu_custom_call.1} parent=11 // pred_fallthru
          _
      $region12: #{tpu_custom_call.1} parent=5 // pred_fallthru
        _
      %p290 = scmp.lt.s32.totalorder %s23, 2
      // Predicated region
      $region45: #{tpu_custom_call.1} parent=5 // pred_check
        %p291 = pneg %p290
      $region46: #{tpu_custom_call.1} parent=5 // pred_check_branch
        %293 = sbr.rel (%p291) target = $region48
      $region47: #{tpu_custom_call.1} parent=5 // pred_region
        // Predicated region
        $region49: #{tpu_custom_call.1} parent=47 // pred_check
          %p294 = pneg %p43
        $region50: #{tpu_custom_call.1} parent=47 // pred_check_branch
          %296 = sbr.rel (%p294) target = $region52
        $region51: #{tpu_custom_call.1} parent=47 // pred_region
          %s297 = sand.u32 %s33, 1
          %s298 = scalar_lea.sflag [#allocation4], %s297
          %s299 = sand.u32 %s33, 1
          %s300 = smul.addr %s299, 16
          %s301 = scalar_lea.vmem [#allocation3], %s300
          %s303 = ssub.s32 256, 256
          %304 = vsyncadd %s298, %s303
          %s305 = smul.addr %s23, 2
          %s306 = smul.addr %s305, 128
          %s307 = scalar_lea.hbm %s0, %s306
          %s309 = sshll.u32 %s301, 4
          %s310 = int_to_ptr.vmem [resolvable:$true] %s309
          %312 = dma.hbm_to_vmem [thread:$0]  %s307, 256, %s310, %s298
        $region52: #{tpu_custom_call.1} parent=47 // pred_fallthru
          _
      $region48: #{tpu_custom_call.1} parent=5 // pred_fallthru
        _
      %p313 = scmp.le.s32.totalorder 1, %s23
      %p314 = scmp.lt.s32.totalorder %s23, 3
      %p315 = pnand %p313, %p314
      %p316 = pneg %p315
      // Predicated region
      $region53: #{tpu_custom_call.1} parent=5 // pred_check
        _
      $region54: #{tpu_custom_call.1} parent=5 // pred_check_branch
        %318 = sbr.rel (%p315) target = $region56
      $region55: #{tpu_custom_call.1} parent=5 // pred_region
        %s319 = ssub.s32 %s23, 1
        %s320 = sand.u32 %s36, 1
        %s321 = scalar_lea.sflag [#allocation4], %s320
        %s322 = sand.u32 %s36, 1
        %s323 = smul.addr %s322, 16
        %s324 = scalar_lea.vmem [#allocation3], %s323
        // Predicated region
        $region57: #{tpu_custom_call.1} parent=55 // pred_check
          %p325 = pneg %p49
        $region58: #{tpu_custom_call.1} parent=55 // pred_check_branch
          %327 = sbr.rel (%p325) target = $region60
        $region59: #{tpu_custom_call.1} parent=55 // pred_region
          %328 = dma.done %s321, 256
        $region60: #{tpu_custom_call.1} parent=55 // pred_fallthru
          _
        // Predicated region
        $region61: #{tpu_custom_call.1} parent=55 // pred_check
          %p329 = pneg %p196
        $region62: #{tpu_custom_call.1} parent=55 // pred_check_branch
          %331 = sbr.rel (%p329) target = $region64
        $region63: #{tpu_custom_call.1} parent=55 // pred_region
          %332 = dma.done [#allocation6], 16
        $region64: #{tpu_custom_call.1} parent=55 // pred_fallthru
          _
        %333 = sfence
        %s334 = sand.u32 %s36, 1
        %s335 = scalar_lea.sflag [#allocation4], %s334
        %s336 = sand.u32 %s36, 1
        %s337 = smul.addr %s336, 16
        %s338 = scalar_lea.vmem [#allocation3], %s337
        %p339 = pneg %p49
        %p340 = pneg %p46
        %p341 = pneg %p70
        %p342 = pneg %p67
        %p343 = pneg %p91
        %p344 = pneg %p88
        %p345 = pneg %p112
        %p346 = pneg %p109
        %p347 = pneg %p133
        %p348 = pneg %p130
        %p349 = pneg %p154
        %p350 = pneg %p151
        %p351 = pneg %p175
        %p352 = pneg %p172
        %p353 = pneg %p196
        %p354 = pneg %p193
        %p355 = pneg %p217
        %p356 = pneg %p214
        %p357 = pneg %p243
        %p358 = pneg %p240
        %s359 = sand.u32 %s230, 1
        %s360 = scalar_lea.sflag [#allocation5], %s359
        %s361 = sand.u32 %s230, 1
        %s362 = smul.addr %s361, 16
        %s363 = scalar_lea.vmem [#allocation8], %s362
        %v364 = vld [vmem:[%s3] sm:$0xf]
        %v365 = vld [vmem:[%s4] sm:$0xf]
        %v366 = vld [vmem:[%s5] sm:$0xff]
        %v367 = vld [vmem:[%s6] sm:$0xff]
        %v368 = vld [vmem:[%s1] sm:$0x3]
        %v369 = vld [vmem:[%s2] sm:$0x3]
        %v370 = vadd.s32 %v368, 4294967293
        %vm371 = vcmp.ge.s32.totalorder %v370, 0
        %vm372 = vcmp.lt.s32.totalorder %v370, 16
        %vm373 = vmand %vm371, %vm372
        %v374 = vadd.s32 %v369, 4294967293
        %vm375 = vcmp.ge.s32.totalorder %v374, 0
        %vm376 = vcmp.lt.s32.totalorder %v374, 16
        %vm377 = vmand %vm375, %vm376
        %v378 = vadd.s32 %v368, 4294967294
        %vm379 = vcmp.ge.s32.totalorder %v378, 0
        %vm380 = vcmp.lt.s32.totalorder %v378, 16
        %vm381 = vmand %vm379, %vm380
        %v382 = vadd.s32 %v369, 4294967294
        %vm383 = vcmp.ge.s32.totalorder %v382, 0
        %vm384 = vcmp.lt.s32.totalorder %v382, 16
        %vm385 = vmand %vm383, %vm384
        %v386 = vadd.s32 %v368, 4294967295
        %vm387 = vcmp.ge.s32.totalorder %v386, 0
        %vm388 = vcmp.lt.s32.totalorder %v386, 16
        %vm389 = vmand %vm387, %vm388
        %v390 = vadd.s32 %v369, 4294967295
        %vm391 = vcmp.ge.s32.totalorder %v390, 0
        %vm392 = vcmp.lt.s32.totalorder %v390, 16
        %vm393 = vmand %vm391, %vm392
        %v394 = vadd.s32 %v368, 1
        %vm395 = vcmp.ge.s32.totalorder %v394, 0
        %vm396 = vcmp.lt.s32.totalorder %v394, 16
        %vm397 = vmand %vm395, %vm396
        %v398 = vadd.s32 %v369, 1
        %vm399 = vcmp.ge.s32.totalorder %v398, 0
        %vm400 = vcmp.lt.s32.totalorder %v398, 16
        %vm401 = vmand %vm399, %vm400
        %v402 = vadd.s32 %v368, 2
        %vm403 = vcmp.ge.s32.totalorder %v402, 0
        %vm404 = vcmp.lt.s32.totalorder %v402, 16
        %vm405 = vmand %vm403, %vm404
        %v406 = vadd.s32 %v369, 2
        %vm407 = vcmp.ge.s32.totalorder %v406, 0
        %vm408 = vcmp.lt.s32.totalorder %v406, 16
        %vm409 = vmand %vm407, %vm408
        %v410 = vadd.s32 %v368, 3
        %vm411 = vcmp.ge.s32.totalorder %v410, 0
        %vm412 = vcmp.lt.s32.totalorder %v410, 16
        %vm413 = vmand %vm411, %vm412
        %v414 = vadd.s32 %v369, 3
        %vm415 = vcmp.ge.s32.totalorder %v414, 0
        %vm416 = vcmp.lt.s32.totalorder %v414, 16
        %vm417 = vmand %vm415, %vm416
        %v418 = vld [vmem:[%s324] sm:$0xff]
        %v419 = vld [vmem:[%s324 + $0x8] sm:$0xff]
        %v420 = vadd.f32 %v418, %v419
        %421 = vadd.xlane.f32.xlu0 %v420
        %v422 = vpop.xlane.xlu0 %421
        %v423 = vrcp.pop 256.0
        %v424 = vmul.f32 %v422, %v423
        %v425 = vmax.f32 %v418, %v419
        %426 = vmax.xlane.f32.xlu0 %v425
        %v427 = vpop.xlane.xlu0 %426
        %vm428 = vcmask 7168
        %v429 = vsel %vm428, %v424, %v427
        %431 = vset.pattern.permute.xlu0 0
        %432 = vperm.xlu0 %431, %v365
        %v433 = vpop.permute.xlu0 %432
        %vm435 = vcmask 64512
        %v437 = vsel %vm435, %v364, 0
        %439 = vmatprep.subr.mxu0 0.0
        %440 = vmatpush1.msra.mxu0 %v429
        %441 = vmatprep.subr.mxu0 0.0
        %442 = vmatpush1.msra.mxu0 0.0
        %443 = vmatprep.subr.mxu0 0.0
        %444 = vmatpush1.msra.mxu0 0.0
        %445 = vmatprep.subr.mxu0 0.0
        %446 = vmatpush1.msra.mxu0 0.0
        %447 = vmatprep.subr.mxu0 0.0
        %448 = vmatpush1.msra.mxu0 0.0
        %449 = vmatprep.subr.mxu0 0.0
        %450 = vmatpush1.msra.mxu0 0.0
        %451 = vmatprep.subr.mxu0 0.0
        %452 = vmatpush1.msra.mxu0 0.0
        %453 = vmatprep.subr.mxu0 0.0
        %454 = vmatpush1.msra.mxu0 0.0
        %455 = vmatprep.subr.mxu0 0.0
        %456 = vmatpush1.msra.mxu0 0.0
        %457 = vmatprep.subr.mxu0 0.0
        %458 = vmatpush1.msra.mxu0 0.0
        %459 = vmatprep.subr.mxu0 0.0
        %460 = vmatpush1.msra.mxu0 0.0
        %461 = vmatprep.subr.mxu0 0.0
        %462 = vmatpush1.msra.mxu0 0.0
        %463 = vmatprep.subr.mxu0 0.0
        %464 = vmatpush1.msra.mxu0 0.0
        %465 = vmatprep.subr.mxu0 0.0
        %466 = vmatpush1.msra.mxu0 0.0
        %467 = vmatprep.subr.mxu0 0.0
        %468 = vmatpush1.msra.mxu0 0.0
        %469 = vmatprep.subr.mxu0 0.0
        %470 = vmatpush1.msra.mxu0 0.0
        %471 = vmatprep.subr.mxu0 0.0
        %472 = vmatpush1.msra.mxu0 0.0
        %473 = vmatprep.subr.mxu0 0.0
        %474 = vmatpush1.msra.mxu0 0.0
        %475 = vmatprep.subr.mxu0 0.0
        %476 = vmatpush1.msra.mxu0 0.0
        %477 = vmatprep.subr.mxu0 0.0
        %478 = vmatpush1.msra.mxu0 0.0
        %479 = vmatprep.subr.mxu0 0.0
        %480 = vmatpush1.msra.mxu0 0.0
        %481 = vmatprep.subr.mxu0 0.0
        %482 = vmatpush1.msra.mxu0 0.0
        %483 = vmatprep.subr.mxu0 0.0
        %484 = vmatpush1.msra.mxu0 0.0
        %485 = vmatprep.subr.mxu0 0.0
        %486 = vmatpush1.msra.mxu0 0.0
        %487 = vmatprep.subr.mxu0 0.0
        %488 = vmatpush1.msra.mxu0 0.0
        %489 = vmatprep.subr.mxu0 0.0
        %490 = vmatpush1.msra.mxu0 0.0
        %491 = vmatprep.subr.mxu0 0.0
        %492 = vmatpush1.msra.mxu0 0.0
        %493 = vmatprep.subr.mxu0 0.0
        %494 = vmatpush1.msra.mxu0 0.0
        %495 = vmatprep.subr.mxu0 0.0
        %496 = vmatpush1.msra.mxu0 0.0
        %497 = vmatprep.subr.mxu0 0.0
        %498 = vmatpush1.msra.mxu0 0.0
        %499 = vmatprep.subr.mxu0 0.0
        %500 = vmatpush1.msra.mxu0 0.0
        %501 = vmatprep.subr.mxu0 0.0
        %502 = vmatpush1.msra.mxu0 0.0
        %503 = vmatprep.mubr.f32.mxu0 0.0
        %504 = vmatmul.mubr.f32.gmra.mrb[0].mxu0 %v437
        %v505 = vpop.f32.mrb[0].mxu0
        %v506 = vadd.f32 %v433, %v505
        %v507 = vpop.f32.mrb[0].mxu0
        %508 = vdwg.mxu0
        %v509 = vmax.f32 %v506, 0.0
        %511 = vset.pattern.permute.xlu0 0
        %512 = vperm.xlu0 %511, %v367
        %v513 = vpop.permute.xlu0 %512
        %vm515 = vcmask 31744
        %v517 = vsel %vm515, %v366, 0
        %vm519 = vcmask 1043456
        %v521 = vsel %vm519, %v509, 0
        %523 = vmatprep.subr.mxu0 0.0
        %524 = vmatpush1.msra.mxu0 %v521
        %525 = vmatprep.subr.mxu0 0.0
        %526 = vmatpush1.msra.mxu0 0.0
        %527 = vmatprep.subr.mxu0 0.0
        %528 = vmatpush1.msra.mxu0 0.0
        %529 = vmatprep.subr.mxu0 0.0
        %530 = vmatpush1.msra.mxu0 0.0
        %531 = vmatprep.subr.mxu0 0.0
        %532 = vmatpush1.msra.mxu0 0.0
        %533 = vmatprep.subr.mxu0 0.0
        %534 = vmatpush1.msra.mxu0 0.0
        %535 = vmatprep.subr.mxu0 0.0
        %536 = vmatpush1.msra.mxu0 0.0
        %537 = vmatprep.subr.mxu0 0.0
        %538 = vmatpush1.msra.mxu0 0.0
        %539 = vmatprep.subr.mxu0 0.0
        %540 = vmatpush1.msra.mxu0 0.0
        %541 = vmatprep.subr.mxu0 0.0
        %542 = vmatpush1.msra.mxu0 0.0
        %543 = vmatprep.subr.mxu0 0.0
        %544 = vmatpush1.msra.mxu0 0.0
        %545 = vmatprep.subr.mxu0 0.0
        %546 = vmatpush1.msra.mxu0 0.0
        %547 = vmatprep.subr.mxu0 0.0
        %548 = vmatpush1.msra.mxu0 0.0
        %549 = vmatprep.subr.mxu0 0.0
        %550 = vmatpush1.msra.mxu0 0.0
        %551 = vmatprep.subr.mxu0 0.0
        %552 = vmatpush1.msra.mxu0 0.0
        %553 = vmatprep.subr.mxu0 0.0
        %554 = vmatpush1.msra.mxu0 0.0
        %555 = vmatprep.subr.mxu0 0.0
        %556 = vmatpush1.msra.mxu0 0.0
        %557 = vmatprep.subr.mxu0 0.0
        %558 = vmatpush1.msra.mxu0 0.0
        %559 = vmatprep.subr.mxu0 0.0
        %560 = vmatpush1.msra.mxu0 0.0
        %561 = vmatprep.subr.mxu0 0.0
        %562 = vmatpush1.msra.mxu0 0.0
        %563 = vmatprep.subr.mxu0 0.0
        %564 = vmatpush1.msra.mxu0 0.0
        %565 = vmatprep.subr.mxu0 0.0
        %566 = vmatpush1.msra.mxu0 0.0
        %567 = vmatprep.subr.mxu0 0.0
        %568 = vmatpush1.msra.mxu0 0.0
        %569 = vmatprep.subr.mxu0 0.0
        %570 = vmatpush1.msra.mxu0 0.0
        %571 = vmatprep.subr.mxu0 0.0
        %572 = vmatpush1.msra.mxu0 0.0
        %573 = vmatprep.subr.mxu0 0.0
        %574 = vmatpush1.msra.mxu0 0.0
        %575 = vmatprep.subr.mxu0 0.0
        %576 = vmatpush1.msra.mxu0 0.0
        %577 = vmatprep.subr.mxu0 0.0
        %578 = vmatpush1.msra.mxu0 0.0
        %579 = vmatprep.subr.mxu0 0.0
        %580 = vmatpush1.msra.mxu0 0.0
        %581 = vmatprep.subr.mxu0 0.0
        %582 = vmatpush1.msra.mxu0 0.0
        %583 = vmatprep.subr.mxu0 0.0
        %584 = vmatpush1.msra.mxu0 0.0
        %585 = vmatprep.subr.mxu0 0.0
        %586 = vmatpush1.msra.mxu0 0.0
        %587 = vmatprep.mubr.f32.mxu0 0.0
        %588 = vmatmul.mubr.f32.gmra.mrb[0].mxu0 %v517
        %v589 = vpop.f32.mrb[0].mxu0
        %v590 = vadd.f32 %v513, %v589
        %v591 = vpop.f32.mrb[0].mxu0
        %592 = vdwg.mxu0
        %vm593 = vcmask 15360
        %v594 = vsel %vm593, %v590, 0.0
        %595 = vadd.xlane.f32.xlu0 %v594
        %v596 = vpop.xlane.xlu0 %595
        %v597 = vxor.u32 %v596, 2147483648
        %v598 = vmul.f32 %v597, 1.442695
        %v599 = vpow.pop %v598
        %v600 = vadd.f32 %v599, 1.0
        %v601 = vrcp.pop %v600
        %v602 = vmul.f32 1.0, %v601
        %v603 = vmul.f32 %v418, %v602
        %v604 = vmul.f32 %v419, %v602
        %v605 = vrot.slane %v603, 4
        %v606 = vadd.f32 %v603, %v605
        %v607 = vrot.slane %v606, 2
        %v608 = vadd.f32 %v606, %v607
        %v609 = vrot.slane %v608, 1
        %v610 = vadd.f32 %v608, %v609
        %v611 = vrot.slane %v604, 4
        %v612 = vadd.f32 %v604, %v611
        %v613 = vrot.slane %v612, 2
        %v614 = vadd.f32 %v612, %v613
        %v615 = vrot.slane %v614, 1
        %v616 = vadd.f32 %v614, %v615
        %v617 = vrcp.pop 8.0
        %v618 = vmul.f32 %v610, %v617
        %v619 = vmul.f32 %v616, %v617
        %v620 = vrot.slane %v603, 4
        %v621 = vmax.f32 %v603, %v620
        %v622 = vrot.slane %v621, 2
        %v623 = vmax.f32 %v621, %v622
        %v624 = vrot.slane %v623, 1
        %v625 = vmax.f32 %v623, %v624
        %v626 = vrot.slane %v604, 4
        %v627 = vmax.f32 %v604, %v626
        %v628 = vrot.slane %v627, 2
        %v629 = vmax.f32 %v627, %v628
        %v630 = vrot.slane %v629, 1
        %v631 = vmax.f32 %v629, %v630
        %632 = vrot.lane.b32.xlu0 %v618, 3
        %v633 = vpop.permute.xlu0 %632
        %634 = vrot.lane.b32.xlu0 %v619, 3
        %v635 = vpop.permute.xlu0 %634
        %v636 = vlaneseq
        %v637 = vand.u32 %v636, 127
        %vm638 = vcmp.lt.s32.totalorder %v637, 3
        %v639 = vsel %vm638, %v633, %v635
        %v640 = vsel %vm638, %v635, %v633
        %v643 = vcombine.low %v640, %v639
        %v645 = vunpack.c.l.s4 1966171168
        %v646 = vunpack.c.0.s8 %v645
        %v647 = vlaneseq
        %v648 = vshrl.u32 %v647, 7
        %v649 = vsub.s32 %v646, %v648
        %v650 = vrot.slane %v643, %v649
        %v652 = vunpack.c.l.s4 1966171168
        %v653 = vunpack.c.0.s8 %v652
        %v654 = vlaneseq
        %v655 = vshrl.u32 %v654, 7
        %v656 = vsub.s32 %v653, %v655
        %v657 = vrot.slane %v650, %v656
        %v659 = vsel %vm373, %v657, 0.0
        %660 = vrot.lane.b32.xlu0 %v625, 3
        %v661 = vpop.permute.xlu0 %660
        %662 = vrot.lane.b32.xlu0 %v631, 3
        %v663 = vpop.permute.xlu0 %662
        %v664 = vsel %vm638, %v661, %v663
        %v665 = vsel %vm638, %v663, %v661
        %v668 = vcombine.low %v665, %v664
        %v670 = vunpack.c.l.s4 1966171168
        %v671 = vunpack.c.0.s8 %v670
        %v672 = vlaneseq
        %v673 = vshrl.u32 %v672, 7
        %v674 = vsub.s32 %v671, %v673
        %v675 = vrot.slane %v668, %v674
        %v677 = vunpack.c.l.s4 1966171168
        %v678 = vunpack.c.0.s8 %v677
        %v679 = vlaneseq
        %v680 = vshrl.u32 %v679, 7
        %v681 = vsub.s32 %v678, %v680
        %v682 = vrot.slane %v675, %v681
        %v684 = vsel %vm373, %v682, 0.0
        %685 = vrot.lane.b32.xlu0 %v618, 2
        %v686 = vpop.permute.xlu0 %685
        %687 = vrot.lane.b32.xlu0 %v619, 2
        %v688 = vpop.permute.xlu0 %687
        %vm689 = vcmp.lt.s32.totalorder %v637, 2
        %v690 = vsel %vm689, %v686, %v688
        %v691 = vsel %vm689, %v688, %v686
        %v694 = vcombine.low %v691, %v690
        %v696 = vunpack.c.l.s4 1966171168
        %v697 = vunpack.c.0.s8 %v696
        %v698 = vlaneseq
        %v699 = vshrl.u32 %v698, 7
        %v700 = vsub.s32 %v697, %v699
        %v701 = vrot.slane %v694, %v700
        %v703 = vunpack.c.l.s4 1966171168
        %v704 = vunpack.c.0.s8 %v703
        %v705 = vlaneseq
        %v706 = vshrl.u32 %v705, 7
        %v707 = vsub.s32 %v704, %v706
        %v708 = vrot.slane %v701, %v707
        %v710 = vsel %vm381, %v708, 0.0
        %711 = vrot.lane.b32.xlu0 %v625, 2
        %v712 = vpop.permute.xlu0 %711
        %713 = vrot.lane.b32.xlu0 %v631, 2
        %v714 = vpop.permute.xlu0 %713
        %v715 = vsel %vm689, %v712, %v714
        %v716 = vsel %vm689, %v714, %v712
        %v719 = vcombine.low %v716, %v715
        %v721 = vunpack.c.l.s4 1966171168
        %v722 = vunpack.c.0.s8 %v721
        %v723 = vlaneseq
        %v724 = vshrl.u32 %v723, 7
        %v725 = vsub.s32 %v722, %v724
        %v726 = vrot.slane %v719, %v725
        %v728 = vunpack.c.l.s4 1966171168
        %v729 = vunpack.c.0.s8 %v728
        %v730 = vlaneseq
        %v731 = vshrl.u32 %v730, 7
        %v732 = vsub.s32 %v729, %v731
        %v733 = vrot.slane %v726, %v732
        %v735 = vsel %vm381, %v733, 0.0
        %736 = vrot.lane.b32.xlu0 %v618, 1
        %v737 = vpop.permute.xlu0 %736
        %738 = vrot.lane.b32.xlu0 %v619, 1
        %v739 = vpop.permute.xlu0 %738
        %vm740 = vcmp.lt.s32.totalorder %v637, 1
        %v741 = vsel %vm740, %v737, %v739
        %v742 = vsel %vm740, %v739, %v737
        %v745 = vcombine.low %v742, %v741
        %v747 = vunpack.c.l.s4 1966171168
        %v748 = vunpack.c.0.s8 %v747
        %v749 = vlaneseq
        %v750 = vshrl.u32 %v749, 7
        %v751 = vsub.s32 %v748, %v750
        %v752 = vrot.slane %v745, %v751
        %v754 = vunpack.c.l.s4 1966171168
        %v755 = vunpack.c.0.s8 %v754
        %v756 = vlaneseq
        %v757 = vshrl.u32 %v756, 7
        %v758 = vsub.s32 %v755, %v757
        %v759 = vrot.slane %v752, %v758
        %v761 = vsel %vm389, %v759, 0.0
        %762 = vrot.lane.b32.xlu0 %v625, 1
        %v763 = vpop.permute.xlu0 %762
        %764 = vrot.lane.b32.xlu0 %v631, 1
        %v765 = vpop.permute.xlu0 %764
        %v766 = vsel %vm740, %v763, %v765
        %v767 = vsel %vm740, %v765, %v763
        %v770 = vcombine.low %v767, %v766
        %v772 = vunpack.c.l.s4 1966171168
        %v773 = vunpack.c.0.s8 %v772
        %v774 = vlaneseq
        %v775 = vshrl.u32 %v774, 7
        %v776 = vsub.s32 %v773, %v775
        %v777 = vrot.slane %v770, %v776
        %v779 = vunpack.c.l.s4 1966171168
        %v780 = vunpack.c.0.s8 %v779
        %v781 = vlaneseq
        %v782 = vshrl.u32 %v781, 7
        %v783 = vsub.s32 %v780, %v782
        %v784 = vrot.slane %v777, %v783
        %v786 = vsel %vm389, %v784, 0.0
        %787 = vrot.lane.b32.xlu0 %v618, 127
        %v788 = vpop.permute.xlu0 %787
        %789 = vrot.lane.b32.xlu0 %v619, 127
        %v790 = vpop.permute.xlu0 %789
        %vm791 = vcmp.lt.s32.totalorder %v637, 127
        %v792 = vsel %vm791, %v788, %v790
        %v793 = vsel %vm791, %v790, %v788
        %v796 = vcombine.low %v792, %v793
        %v798 = vunpack.c.l.s4 1966171168
        %v799 = vunpack.c.0.s8 %v798
        %v800 = vlaneseq
        %v801 = vshrl.u32 %v800, 7
        %v802 = vsub.s32 %v799, %v801
        %v803 = vrot.slane %v796, %v802
        %v805 = vunpack.c.l.s4 1966171168
        %v806 = vunpack.c.0.s8 %v805
        %v807 = vlaneseq
        %v808 = vshrl.u32 %v807, 7
        %v809 = vsub.s32 %v806, %v808
        %v810 = vrot.slane %v803, %v809
        %v812 = vsel %vm397, %v810, 0.0
        %813 = vrot.lane.b32.xlu0 %v625, 127
        %v814 = vpop.permute.xlu0 %813
        %815 = vrot.lane.b32.xlu0 %v631, 127
        %v816 = vpop.permute.xlu0 %815
        %v817 = vsel %vm791, %v814, %v816
        %v818 = vsel %vm791, %v816, %v814
        %v821 = vcombine.low %v817, %v818
        %v823 = vunpack.c.l.s4 1966171168
        %v824 = vunpack.c.0.s8 %v823
        %v825 = vlaneseq
        %v826 = vshrl.u32 %v825, 7
        %v827 = vsub.s32 %v824, %v826
        %v828 = vrot.slane %v821, %v827
        %v830 = vunpack.c.l.s4 1966171168
        %v831 = vunpack.c.0.s8 %v830
        %v832 = vlaneseq
        %v833 = vshrl.u32 %v832, 7
        %v834 = vsub.s32 %v831, %v833
        %v835 = vrot.slane %v828, %v834
        %v837 = vsel %vm397, %v835, 0.0
        %838 = vrot.lane.b32.xlu0 %v618, 126
        %v839 = vpop.permute.xlu0 %838
        %840 = vrot.lane.b32.xlu0 %v619, 126
        %v841 = vpop.permute.xlu0 %840
        %vm842 = vcmp.lt.s32.totalorder %v637, 126
        %v843 = vsel %vm842, %v839, %v841
        %v844 = vsel %vm842, %v841, %v839
        %v847 = vcombine.low %v843, %v844
        %v849 = vunpack.c.l.s4 1966171168
        %v850 = vunpack.c.0.s8 %v849
        %v851 = vlaneseq
        %v852 = vshrl.u32 %v851, 7
        %v853 = vsub.s32 %v850, %v852
        %v854 = vrot.slane %v847, %v853
        %v856 = vunpack.c.l.s4 1966171168
        %v857 = vunpack.c.0.s8 %v856
        %v858 = vlaneseq
        %v859 = vshrl.u32 %v858, 7
        %v860 = vsub.s32 %v857, %v859
        %v861 = vrot.slane %v854, %v860
        %v863 = vsel %vm405, %v861, 0.0
        %864 = vrot.lane.b32.xlu0 %v625, 126
        %v865 = vpop.permute.xlu0 %864
        %866 = vrot.lane.b32.xlu0 %v631, 126
        %v867 = vpop.permute.xlu0 %866
        %v868 = vsel %vm842, %v865, %v867
        %v869 = vsel %vm842, %v867, %v865
        %v872 = vcombine.low %v868, %v869
        %v874 = vunpack.c.l.s4 1966171168
        %v875 = vunpack.c.0.s8 %v874
        %v876 = vlaneseq
        %v877 = vshrl.u32 %v876, 7
        %v878 = vsub.s32 %v875, %v877
        %v879 = vrot.slane %v872, %v878
        %v881 = vunpack.c.l.s4 1966171168
        %v882 = vunpack.c.0.s8 %v881
        %v883 = vlaneseq
        %v884 = vshrl.u32 %v883, 7
        %v885 = vsub.s32 %v882, %v884
        %v886 = vrot.slane %v879, %v885
        %v888 = vsel %vm405, %v886, 0.0
        %889 = vrot.lane.b32.xlu0 %v618, 125
        %v890 = vpop.permute.xlu0 %889
        %891 = vrot.lane.b32.xlu0 %v619, 125
        %v892 = vpop.permute.xlu0 %891
        %vm893 = vcmp.lt.s32.totalorder %v637, 125
        %v894 = vsel %vm893, %v890, %v892
        %v895 = vsel %vm893, %v892, %v890
        %v898 = vcombine.low %v894, %v895
        %v900 = vunpack.c.l.s4 1966171168
        %v901 = vunpack.c.0.s8 %v900
        %v902 = vlaneseq
        %v903 = vshrl.u32 %v902, 7
        %v904 = vsub.s32 %v901, %v903
        %v905 = vrot.slane %v898, %v904
        %v907 = vunpack.c.l.s4 1966171168
        %v908 = vunpack.c.0.s8 %v907
        %v909 = vlaneseq
        %v910 = vshrl.u32 %v909, 7
        %v911 = vsub.s32 %v908, %v910
        %v912 = vrot.slane %v905, %v911
        %v914 = vsel %vm413, %v912, 0.0
        %915 = vrot.lane.b32.xlu0 %v625, 125
        %v916 = vpop.permute.xlu0 %915
        %917 = vrot.lane.b32.xlu0 %v631, 125
        %v918 = vpop.permute.xlu0 %917
        %v919 = vsel %vm893, %v916, %v918
        %v920 = vsel %vm893, %v918, %v916
        %v923 = vcombine.low %v919, %v920
        %v925 = vunpack.c.l.s4 1966171168
        %v926 = vunpack.c.0.s8 %v925
        %v927 = vlaneseq
        %v928 = vshrl.u32 %v927, 7
        %v929 = vsub.s32 %v926, %v928
        %v930 = vrot.slane %v923, %v929
        %v932 = vunpack.c.l.s4 1966171168
        %v933 = vunpack.c.0.s8 %v932
        %v934 = vlaneseq
        %v935 = vshrl.u32 %v934, 7
        %v936 = vsub.s32 %v933, %v935
        %v937 = vrot.slane %v930, %v936
        %v939 = vsel %vm413, %v937, 0.0
        %s940 = sld [smem:[#allocation7]]
        %v941 = vstv %s940
        %v942 = vmul.f32 %v941, %v659
        %v943 = vadd.f32 %v942, 0.0
        %s944 = sld [smem:[#allocation7 + $0x31]]
        %v945 = vstv %s944
        %v946 = vmul.f32 %v945, %v684
        %v947 = vadd.f32 %v943, %v946
        %s948 = sld [smem:[#allocation7 + $0x1]]
        %v949 = vstv %s948
        %v950 = vmul.f32 %v949, %v710
        %v951 = vadd.f32 %v947, %v950
        %s952 = sld [smem:[#allocation7 + $0x32]]
        %v953 = vstv %s952
        %v954 = vmul.f32 %v953, %v735
        %v955 = vadd.f32 %v951, %v954
        %s956 = sld [smem:[#allocation7 + $0x2]]
        %v957 = vstv %s956
        %v958 = vmul.f32 %v957, %v761
        %v959 = vadd.f32 %v955, %v958
        %s960 = sld [smem:[#allocation7 + $0x33]]
        %v961 = vstv %s960
        %v962 = vmul.f32 %v961, %v786
        %v963 = vadd.f32 %v959, %v962
        %s964 = sld [smem:[#allocation7 + $0x3]]
        %v965 = vstv %s964
        %v966 = vmul.f32 %v965, %v618
        %v967 = vmul.f32 %v965, %v619
        %v970 = vcombine.low %v966, %v967
        %v972 = vunpack.c.l.s4 1966171168
        %v973 = vunpack.c.0.s8 %v972
        %v974 = vlaneseq
        %v975 = vshrl.u32 %v974, 7
        %v976 = vsub.s32 %v973, %v975
        %v977 = vrot.slane %v970, %v976
        %v979 = vunpack.c.l.s4 1966171168
        %v980 = vunpack.c.0.s8 %v979
        %v981 = vlaneseq
        %v982 = vshrl.u32 %v981, 7
        %v983 = vsub.s32 %v980, %v982
        %v984 = vrot.slane %v977, %v983
        %v986 = vadd.f32 %v963, %v984
        %s987 = sld [smem:[#allocation7 + $0x34]]
        %v988 = vstv %s987
        %v989 = vmul.f32 %v988, %v625
        %v990 = vmul.f32 %v988, %v631
        %v993 = vcombine.low %v989, %v990
        %v995 = vunpack.c.l.s4 1966171168
        %v996 = vunpack.c.0.s8 %v995
        %v997 = vlaneseq
        %v998 = vshrl.u32 %v997, 7
        %v999 = vsub.s32 %v996, %v998
        %v1000 = vrot.slane %v993, %v999
        %v1002 = vunpack.c.l.s4 1966171168
        %v1003 = vunpack.c.0.s8 %v1002
        %v1004 = vlaneseq
        %v1005 = vshrl.u32 %v1004, 7
        %v1006 = vsub.s32 %v1003, %v1005
        %v1007 = vrot.slane %v1000, %v1006
        %v1009 = vadd.f32 %v986, %v1007
        %s1010 = sld [smem:[#allocation7 + $0x4]]
        %v1011 = vstv %s1010
        %v1012 = vmul.f32 %v1011, %v812
        %v1013 = vadd.f32 %v1009, %v1012
        %s1014 = sld [smem:[#allocation7 + $0x35]]
        %v1015 = vstv %s1014
        %v1016 = vmul.f32 %v1015, %v837
        %v1017 = vadd.f32 %v1013, %v1016
        %s1018 = sld [smem:[#allocation7 + $0x5]]
        %v1019 = vstv %s1018
        %v1020 = vmul.f32 %v1019, %v863
        %v1021 = vadd.f32 %v1017, %v1020
        %s1022 = sld [smem:[#allocation7 + $0x36]]
        %v1023 = vstv %s1022
        %v1024 = vmul.f32 %v1023, %v888
        %v1025 = vadd.f32 %v1021, %v1024
        %s1026 = sld [smem:[#allocation7 + $0x6]]
        %v1027 = vstv %s1026
        %v1028 = vmul.f32 %v1027, %v914
        %v1029 = vadd.f32 %v1025, %v1028
        %s1030 = sld [smem:[#allocation7 + $0x37]]
        %v1031 = vstv %s1030
        %v1032 = vmul.f32 %v1031, %v939
        %v1033 = vadd.f32 %v1029, %v1032
        %v1035 = vlaneseq
        %v1036 = vshrl.u32 %v1035, 7
        %v1037 = vsub.s32 0, %v1036
        %v1038 = vrot.slane %v1033, %v1037
        %v1039 = vlaneseq
        %v1040 = vshrl.u32 %v1039, 7
        %v1041 = vsub.s32 1, %v1040
        %v1042 = vrot.slane %v1033, %v1041
        %1045 = vrot.lane.b32.xlu0 %v1038, 48
        %v1046 = vpop.permute.xlu0 %1045
        %1047 = vrot.lane.b32.xlu0 %v1042, 48
        %v1048 = vpop.permute.xlu0 %1047
        %vm1049 = vcmp.lt.s32.totalorder %v637, 48
        %v1050 = vsel %vm1049, %v1046, %v1048
        %v1051 = vsel %vm1049, %v1048, %v1046
        %v1054 = vcombine.low %v1051, %v1050
        %v1056 = vunpack.c.l.s4 1966171168
        %v1057 = vunpack.c.0.s8 %v1056
        %v1058 = vlaneseq
        %v1059 = vshrl.u32 %v1058, 7
        %v1060 = vsub.s32 %v1057, %v1059
        %v1061 = vrot.slane %v1054, %v1060
        %v1063 = vunpack.c.l.s4 1966171168
        %v1064 = vunpack.c.0.s8 %v1063
        %v1065 = vlaneseq
        %v1066 = vshrl.u32 %v1065, 7
        %v1067 = vsub.s32 %v1064, %v1066
        %v1068 = vrot.slane %v1061, %v1067
        %v1070 = vsel %vm377, %v1068, 0.0
        %v1071 = vadd.f32 %v1070, 0.0
        %s1072 = sld [smem:[#allocation7 + $0x7]]
        %v1073 = vstv %s1072
        %v1074 = vmul.f32 %v1073, %v659
        %v1075 = vadd.f32 %v1074, 0.0
        %s1076 = sld [smem:[#allocation7 + $0x38]]
        %v1077 = vstv %s1076
        %v1078 = vmul.f32 %v1077, %v684
        %v1079 = vadd.f32 %v1075, %v1078
        %s1080 = sld [smem:[#allocation7 + $0x8]]
        %v1081 = vstv %s1080
        %v1082 = vmul.f32 %v1081, %v710
        %v1083 = vadd.f32 %v1079, %v1082
        %s1084 = sld [smem:[#allocation7 + $0x39]]
        %v1085 = vstv %s1084
        %v1086 = vmul.f32 %v1085, %v735
        %v1087 = vadd.f32 %v1083, %v1086
        %s1088 = sld [smem:[#allocation7 + $0x9]]
        %v1089 = vstv %s1088
        %v1090 = vmul.f32 %v1089, %v761
        %v1091 = vadd.f32 %v1087, %v1090
        %s1092 = sld [smem:[#allocation7 + $0x3a]]
        %v1093 = vstv %s1092
        %v1094 = vmul.f32 %v1093, %v786
        %v1095 = vadd.f32 %v1091, %v1094
        %s1096 = sld [smem:[#allocation7 + $0xa]]
        %v1097 = vstv %s1096
        %v1098 = vmul.f32 %v1097, %v618
        %v1099 = vmul.f32 %v1097, %v619
        %v1102 = vcombine.low %v1098, %v1099
        %v1104 = vunpack.c.l.s4 1966171168
        %v1105 = vunpack.c.0.s8 %v1104
        %v1106 = vlaneseq
        %v1107 = vshrl.u32 %v1106, 7
        %v1108 = vsub.s32 %v1105, %v1107
        %v1109 = vrot.slane %v1102, %v1108
        %v1111 = vunpack.c.l.s4 1966171168
        %v1112 = vunpack.c.0.s8 %v1111
        %v1113 = vlaneseq
        %v1114 = vshrl.u32 %v1113, 7
        %v1115 = vsub.s32 %v1112, %v1114
        %v1116 = vrot.slane %v1109, %v1115
        %v1118 = vadd.f32 %v1095, %v1116
        %s1119 = sld [smem:[#allocation7 + $0x3b]]
        %v1120 = vstv %s1119
        %v1121 = vmul.f32 %v1120, %v625
        %v1122 = vmul.f32 %v1120, %v631
        %v1125 = vcombine.low %v1121, %v1122
        %v1127 = vunpack.c.l.s4 1966171168
        %v1128 = vunpack.c.0.s8 %v1127
        %v1129 = vlaneseq
        %v1130 = vshrl.u32 %v1129, 7
        %v1131 = vsub.s32 %v1128, %v1130
        %v1132 = vrot.slane %v1125, %v1131
        %v1134 = vunpack.c.l.s4 1966171168
        %v1135 = vunpack.c.0.s8 %v1134
        %v1136 = vlaneseq
        %v1137 = vshrl.u32 %v1136, 7
        %v1138 = vsub.s32 %v1135, %v1137
        %v1139 = vrot.slane %v1132, %v1138
        %v1141 = vadd.f32 %v1118, %v1139
        %s1142 = sld [smem:[#allocation7 + $0xb]]
        %v1143 = vstv %s1142
        %v1144 = vmul.f32 %v1143, %v812
        %v1145 = vadd.f32 %v1141, %v1144
        %s1146 = sld [smem:[#allocation7 + $0x3c]]
        %v1147 = vstv %s1146
        %v1148 = vmul.f32 %v1147, %v837
        %v1149 = vadd.f32 %v1145, %v1148
        %s1150 = sld [smem:[#allocation7 + $0xc]]
        %v1151 = vstv %s1150
        %v1152 = vmul.f32 %v1151, %v863
        %v1153 = vadd.f32 %v1149, %v1152
        %s1154 = sld [smem:[#allocation7 + $0x3d]]
        %v1155 = vstv %s1154
        %v1156 = vmul.f32 %v1155, %v888
        %v1157 = vadd.f32 %v1153, %v1156
        %s1158 = sld [smem:[#allocation7 + $0xd]]
        %v1159 = vstv %s1158
        %v1160 = vmul.f32 %v1159, %v914
        %v1161 = vadd.f32 %v1157, %v1160
        %s1162 = sld [smem:[#allocation7 + $0x3e]]
        %v1163 = vstv %s1162
        %v1164 = vmul.f32 %v1163, %v939
        %v1165 = vadd.f32 %v1161, %v1164
        %v1167 = vlaneseq
        %v1168 = vshrl.u32 %v1167, 7
        %v1169 = vsub.s32 0, %v1168
        %v1170 = vrot.slane %v1165, %v1169
        %v1171 = vlaneseq
        %v1172 = vshrl.u32 %v1171, 7
        %v1173 = vsub.s32 1, %v1172
        %v1174 = vrot.slane %v1165, %v1173
        %1177 = vrot.lane.b32.xlu0 %v1170, 32
        %v1178 = vpop.permute.xlu0 %1177
        %1179 = vrot.lane.b32.xlu0 %v1174, 32
        %v1180 = vpop.permute.xlu0 %1179
        %vm1181 = vcmp.lt.s32.totalorder %v637, 32
        %v1182 = vsel %vm1181, %v1178, %v1180
        %v1183 = vsel %vm1181, %v1180, %v1178
        %v1186 = vcombine.low %v1183, %v1182
        %v1188 = vunpack.c.l.s4 1966171168
        %v1189 = vunpack.c.0.s8 %v1188
        %v1190 = vlaneseq
        %v1191 = vshrl.u32 %v1190, 7
        %v1192 = vsub.s32 %v1189, %v1191
        %v1193 = vrot.slane %v1186, %v1192
        %v1195 = vunpack.c.l.s4 1966171168
        %v1196 = vunpack.c.0.s8 %v1195
        %v1197 = vlaneseq
        %v1198 = vshrl.u32 %v1197, 7
        %v1199 = vsub.s32 %v1196, %v1198
        %v1200 = vrot.slane %v1193, %v1199
        %v1202 = vsel %vm385, %v1200, 0.0
        %v1203 = vadd.f32 %v1071, %v1202
        %s1204 = sld [smem:[#allocation7 + $0xe]]
        %v1205 = vstv %s1204
        %v1206 = vmul.f32 %v1205, %v659
        %v1207 = vadd.f32 %v1206, 0.0
        %s1208 = sld [smem:[#allocation7 + $0x3f]]
        %v1209 = vstv %s1208
        %v1210 = vmul.f32 %v1209, %v684
        %v1211 = vadd.f32 %v1207, %v1210
        %s1212 = sld [smem:[#allocation7 + $0xf]]
        %v1213 = vstv %s1212
        %v1214 = vmul.f32 %v1213, %v710
        %v1215 = vadd.f32 %v1211, %v1214
        %s1216 = sld [smem:[#allocation7 + $0x40]]
        %v1217 = vstv %s1216
        %v1218 = vmul.f32 %v1217, %v735
        %v1219 = vadd.f32 %v1215, %v1218
        %s1220 = sld [smem:[#allocation7 + $0x10]]
        %v1221 = vstv %s1220
        %v1222 = vmul.f32 %v1221, %v761
        %v1223 = vadd.f32 %v1219, %v1222
        %s1224 = sld [smem:[#allocation7 + $0x41]]
        %v1225 = vstv %s1224
        %v1226 = vmul.f32 %v1225, %v786
        %v1227 = vadd.f32 %v1223, %v1226
        %s1228 = sld [smem:[#allocation7 + $0x11]]
        %v1229 = vstv %s1228
        %v1230 = vmul.f32 %v1229, %v618
        %v1231 = vmul.f32 %v1229, %v619
        %v1234 = vcombine.low %v1230, %v1231
        %v1236 = vunpack.c.l.s4 1966171168
        %v1237 = vunpack.c.0.s8 %v1236
        %v1238 = vlaneseq
        %v1239 = vshrl.u32 %v1238, 7
        %v1240 = vsub.s32 %v1237, %v1239
        %v1241 = vrot.slane %v1234, %v1240
        %v1243 = vunpack.c.l.s4 1966171168
        %v1244 = vunpack.c.0.s8 %v1243
        %v1245 = vlaneseq
        %v1246 = vshrl.u32 %v1245, 7
        %v1247 = vsub.s32 %v1244, %v1246
        %v1248 = vrot.slane %v1241, %v1247
        %v1250 = vadd.f32 %v1227, %v1248
        %s1251 = sld [smem:[#allocation7 + $0x42]]
        %v1252 = vstv %s1251
        %v1253 = vmul.f32 %v1252, %v625
        %v1254 = vmul.f32 %v1252, %v631
        %v1257 = vcombine.low %v1253, %v1254
        %v1259 = vunpack.c.l.s4 1966171168
        %v1260 = vunpack.c.0.s8 %v1259
        %v1261 = vlaneseq
        %v1262 = vshrl.u32 %v1261, 7
        %v1263 = vsub.s32 %v1260, %v1262
        %v1264 = vrot.slane %v1257, %v1263
        %v1266 = vunpack.c.l.s4 1966171168
        %v1267 = vunpack.c.0.s8 %v1266
        %v1268 = vlaneseq
        %v1269 = vshrl.u32 %v1268, 7
        %v1270 = vsub.s32 %v1267, %v1269
        %v1271 = vrot.slane %v1264, %v1270
        %v1273 = vadd.f32 %v1250, %v1271
        %s1274 = sld [smem:[#allocation7 + $0x12]]
        %v1275 = vstv %s1274
        %v1276 = vmul.f32 %v1275, %v812
        %v1277 = vadd.f32 %v1273, %v1276
        %s1278 = sld [smem:[#allocation7 + $0x43]]
        %v1279 = vstv %s1278
        %v1280 = vmul.f32 %v1279, %v837
        %v1281 = vadd.f32 %v1277, %v1280
        %s1282 = sld [smem:[#allocation7 + $0x13]]
        %v1283 = vstv %s1282
        %v1284 = vmul.f32 %v1283, %v863
        %v1285 = vadd.f32 %v1281, %v1284
        %s1286 = sld [smem:[#allocation7 + $0x44]]
        %v1287 = vstv %s1286
        %v1288 = vmul.f32 %v1287, %v888
        %v1289 = vadd.f32 %v1285, %v1288
        %s1290 = sld [smem:[#allocation7 + $0x14]]
        %v1291 = vstv %s1290
        %v1292 = vmul.f32 %v1291, %v914
        %v1293 = vadd.f32 %v1289, %v1292
        %s1294 = sld [smem:[#allocation7 + $0x45]]
        %v1295 = vstv %s1294
        %v1296 = vmul.f32 %v1295, %v939
        %v1297 = vadd.f32 %v1293, %v1296
        %v1299 = vlaneseq
        %v1300 = vshrl.u32 %v1299, 7
        %v1301 = vsub.s32 0, %v1300
        %v1302 = vrot.slane %v1297, %v1301
        %v1303 = vlaneseq
        %v1304 = vshrl.u32 %v1303, 7
        %v1305 = vsub.s32 1, %v1304
        %v1306 = vrot.slane %v1297, %v1305
        %1309 = vrot.lane.b32.xlu0 %v1302, 16
        %v1310 = vpop.permute.xlu0 %1309
        %1311 = vrot.lane.b32.xlu0 %v1306, 16
        %v1312 = vpop.permute.xlu0 %1311
        %vm1313 = vcmp.lt.s32.totalorder %v637, 16
        %v1314 = vsel %vm1313, %v1310, %v1312
        %v1315 = vsel %vm1313, %v1312, %v1310
        %v1318 = vcombine.low %v1315, %v1314
        %v1320 = vunpack.c.l.s4 1966171168
        %v1321 = vunpack.c.0.s8 %v1320
        %v1322 = vlaneseq
        %v1323 = vshrl.u32 %v1322, 7
        %v1324 = vsub.s32 %v1321, %v1323
        %v1325 = vrot.slane %v1318, %v1324
        %v1327 = vunpack.c.l.s4 1966171168
        %v1328 = vunpack.c.0.s8 %v1327
        %v1329 = vlaneseq
        %v1330 = vshrl.u32 %v1329, 7
        %v1331 = vsub.s32 %v1328, %v1330
        %v1332 = vrot.slane %v1325, %v1331
        %v1334 = vsel %vm393, %v1332, 0.0
        %v1335 = vadd.f32 %v1203, %v1334
        %s1336 = sld [smem:[#allocation7 + $0x15]]
        %v1337 = vstv %s1336
        %v1338 = vmul.f32 %v1337, %v659
        %v1339 = vadd.f32 %v1338, 0.0
        %s1340 = sld [smem:[#allocation7 + $0x46]]
        %v1341 = vstv %s1340
        %v1342 = vmul.f32 %v1341, %v684
        %v1343 = vadd.f32 %v1339, %v1342
        %s1344 = sld [smem:[#allocation7 + $0x16]]
        %v1345 = vstv %s1344
        %v1346 = vmul.f32 %v1345, %v710
        %v1347 = vadd.f32 %v1343, %v1346
        %s1348 = sld [smem:[#allocation7 + $0x47]]
        %v1349 = vstv %s1348
        %v1350 = vmul.f32 %v1349, %v735
        %v1351 = vadd.f32 %v1347, %v1350
        %s1352 = sld [smem:[#allocation7 + $0x17]]
        %v1353 = vstv %s1352
        %v1354 = vmul.f32 %v1353, %v761
        %v1355 = vadd.f32 %v1351, %v1354
        %s1356 = sld [smem:[#allocation7 + $0x48]]
        %v1357 = vstv %s1356
        %v1358 = vmul.f32 %v1357, %v786
        %v1359 = vadd.f32 %v1355, %v1358
        %s1360 = sld [smem:[#allocation7 + $0x18]]
        %v1361 = vstv %s1360
        %v1362 = vmul.f32 %v1361, %v618
        %v1363 = vmul.f32 %v1361, %v619
        %v1366 = vcombine.low %v1362, %v1363
        %v1368 = vunpack.c.l.s4 1966171168
        %v1369 = vunpack.c.0.s8 %v1368
        %v1370 = vlaneseq
        %v1371 = vshrl.u32 %v1370, 7
        %v1372 = vsub.s32 %v1369, %v1371
        %v1373 = vrot.slane %v1366, %v1372
        %v1375 = vunpack.c.l.s4 1966171168
        %v1376 = vunpack.c.0.s8 %v1375
        %v1377 = vlaneseq
        %v1378 = vshrl.u32 %v1377, 7
        %v1379 = vsub.s32 %v1376, %v1378
        %v1380 = vrot.slane %v1373, %v1379
        %v1382 = vadd.f32 %v1359, %v1380
        %s1383 = sld [smem:[#allocation7 + $0x49]]
        %v1384 = vstv %s1383
        %v1385 = vmul.f32 %v1384, %v625
        %v1386 = vmul.f32 %v1384, %v631
        %v1389 = vcombine.low %v1385, %v1386
        %v1391 = vunpack.c.l.s4 1966171168
        %v1392 = vunpack.c.0.s8 %v1391
        %v1393 = vlaneseq
        %v1394 = vshrl.u32 %v1393, 7
        %v1395 = vsub.s32 %v1392, %v1394
        %v1396 = vrot.slane %v1389, %v1395
        %v1398 = vunpack.c.l.s4 1966171168
        %v1399 = vunpack.c.0.s8 %v1398
        %v1400 = vlaneseq
        %v1401 = vshrl.u32 %v1400, 7
        %v1402 = vsub.s32 %v1399, %v1401
        %v1403 = vrot.slane %v1396, %v1402
        %v1405 = vadd.f32 %v1382, %v1403
        %s1406 = sld [smem:[#allocation7 + $0x19]]
        %v1407 = vstv %s1406
        %v1408 = vmul.f32 %v1407, %v812
        %v1409 = vadd.f32 %v1405, %v1408
        %s1410 = sld [smem:[#allocation7 + $0x4a]]
        %v1411 = vstv %s1410
        %v1412 = vmul.f32 %v1411, %v837
        %v1413 = vadd.f32 %v1409, %v1412
        %s1414 = sld [smem:[#allocation7 + $0x1a]]
        %v1415 = vstv %s1414
        %v1416 = vmul.f32 %v1415, %v863
        %v1417 = vadd.f32 %v1413, %v1416
        %s1418 = sld [smem:[#allocation7 + $0x4b]]
        %v1419 = vstv %s1418
        %v1420 = vmul.f32 %v1419, %v888
        %v1421 = vadd.f32 %v1417, %v1420
        %s1422 = sld [smem:[#allocation7 + $0x1b]]
        %v1423 = vstv %s1422
        %v1424 = vmul.f32 %v1423, %v914
        %v1425 = vadd.f32 %v1421, %v1424
        %s1426 = sld [smem:[#allocation7 + $0x4c]]
        %v1427 = vstv %s1426
        %v1428 = vmul.f32 %v1427, %v939
        %v1429 = vadd.f32 %v1425, %v1428
        %v1430 = vadd.f32 %v1335, %v1429
        %s1431 = sld [smem:[#allocation7 + $0x1c]]
        %v1432 = vstv %s1431
        %v1433 = vmul.f32 %v1432, %v659
        %v1434 = vadd.f32 %v1433, 0.0
        %s1435 = sld [smem:[#allocation7 + $0x4d]]
        %v1436 = vstv %s1435
        %v1437 = vmul.f32 %v1436, %v684
        %v1438 = vadd.f32 %v1434, %v1437
        %s1439 = sld [smem:[#allocation7 + $0x1d]]
        %v1440 = vstv %s1439
        %v1441 = vmul.f32 %v1440, %v710
        %v1442 = vadd.f32 %v1438, %v1441
        %s1443 = sld [smem:[#allocation7 + $0x4e]]
        %v1444 = vstv %s1443
        %v1445 = vmul.f32 %v1444, %v735
        %v1446 = vadd.f32 %v1442, %v1445
        %s1447 = sld [smem:[#allocation7 + $0x1e]]
        %v1448 = vstv %s1447
        %v1449 = vmul.f32 %v1448, %v761
        %v1450 = vadd.f32 %v1446, %v1449
        %s1451 = sld [smem:[#allocation7 + $0x4f]]
        %v1452 = vstv %s1451
        %v1453 = vmul.f32 %v1452, %v786
        %v1454 = vadd.f32 %v1450, %v1453
        %s1455 = sld [smem:[#allocation7 + $0x1f]]
        %v1456 = vstv %s1455
        %v1457 = vmul.f32 %v1456, %v618
        %v1458 = vmul.f32 %v1456, %v619
        %v1461 = vcombine.low %v1457, %v1458
        %v1463 = vunpack.c.l.s4 1966171168
        %v1464 = vunpack.c.0.s8 %v1463
        %v1465 = vlaneseq
        %v1466 = vshrl.u32 %v1465, 7
        %v1467 = vsub.s32 %v1464, %v1466
        %v1468 = vrot.slane %v1461, %v1467
        %v1470 = vunpack.c.l.s4 1966171168
        %v1471 = vunpack.c.0.s8 %v1470
        %v1472 = vlaneseq
        %v1473 = vshrl.u32 %v1472, 7
        %v1474 = vsub.s32 %v1471, %v1473
        %v1475 = vrot.slane %v1468, %v1474
        %v1477 = vadd.f32 %v1454, %v1475
        %s1478 = sld [smem:[#allocation7 + $0x50]]
        %v1479 = vstv %s1478
        %v1480 = vmul.f32 %v1479, %v625
        %v1481 = vmul.f32 %v1479, %v631
        %v1484 = vcombine.low %v1480, %v1481
        %v1486 = vunpack.c.l.s4 1966171168
        %v1487 = vunpack.c.0.s8 %v1486
        %v1488 = vlaneseq
        %v1489 = vshrl.u32 %v1488, 7
        %v1490 = vsub.s32 %v1487, %v1489
        %v1491 = vrot.slane %v1484, %v1490
        %v1493 = vunpack.c.l.s4 1966171168
        %v1494 = vunpack.c.0.s8 %v1493
        %v1495 = vlaneseq
        %v1496 = vshrl.u32 %v1495, 7
        %v1497 = vsub.s32 %v1494, %v1496
        %v1498 = vrot.slane %v1491, %v1497
        %v1500 = vadd.f32 %v1477, %v1498
        %s1501 = sld [smem:[#allocation7 + $0x20]]
        %v1502 = vstv %s1501
        %v1503 = vmul.f32 %v1502, %v812
        %v1504 = vadd.f32 %v1500, %v1503
        %s1505 = sld [smem:[#allocation7 + $0x51]]
        %v1506 = vstv %s1505
        %v1507 = vmul.f32 %v1506, %v837
        %v1508 = vadd.f32 %v1504, %v1507
        %s1509 = sld [smem:[#allocation7 + $0x21]]
        %v1510 = vstv %s1509
        %v1511 = vmul.f32 %v1510, %v863
        %v1512 = vadd.f32 %v1508, %v1511
        %s1513 = sld [smem:[#allocation7 + $0x52]]
        %v1514 = vstv %s1513
        %v1515 = vmul.f32 %v1514, %v888
        %v1516 = vadd.f32 %v1512, %v1515
        %s1517 = sld [smem:[#allocation7 + $0x22]]
        %v1518 = vstv %s1517
        %v1519 = vmul.f32 %v1518, %v914
        %v1520 = vadd.f32 %v1516, %v1519
        %s1521 = sld [smem:[#allocation7 + $0x53]]
        %v1522 = vstv %s1521
        %v1523 = vmul.f32 %v1522, %v939
        %v1524 = vadd.f32 %v1520, %v1523
        %v1526 = vlaneseq
        %v1527 = vshrl.u32 %v1526, 7
        %v1528 = vsub.s32 0, %v1527
        %v1529 = vrot.slane %v1524, %v1528
        %v1530 = vlaneseq
        %v1531 = vshrl.u32 %v1530, 7
        %v1532 = vsub.s32 1, %v1531
        %v1533 = vrot.slane %v1524, %v1532
        %1536 = vrot.lane.b32.xlu0 %v1529, 112
        %v1537 = vpop.permute.xlu0 %1536
        %1538 = vrot.lane.b32.xlu0 %v1533, 112
        %v1539 = vpop.permute.xlu0 %1538
        %vm1540 = vcmp.lt.s32.totalorder %v637, 112
        %v1541 = vsel %vm1540, %v1537, %v1539
        %v1542 = vsel %vm1540, %v1539, %v1537
        %v1545 = vcombine.low %v1541, %v1542
        %v1547 = vunpack.c.l.s4 1966171168
        %v1548 = vunpack.c.0.s8 %v1547
        %v1549 = vlaneseq
        %v1550 = vshrl.u32 %v1549, 7
        %v1551 = vsub.s32 %v1548, %v1550
        %v1552 = vrot.slane %v1545, %v1551
        %v1554 = vunpack.c.l.s4 1966171168
        %v1555 = vunpack.c.0.s8 %v1554
        %v1556 = vlaneseq
        %v1557 = vshrl.u32 %v1556, 7
        %v1558 = vsub.s32 %v1555, %v1557
        %v1559 = vrot.slane %v1552, %v1558
        %v1561 = vsel %vm401, %v1559, 0.0
        %v1562 = vadd.f32 %v1430, %v1561
        %s1563 = sld [smem:[#allocation7 + $0x23]]
        %v1564 = vstv %s1563
        %v1565 = vmul.f32 %v1564, %v659
        %v1566 = vadd.f32 %v1565, 0.0
        %s1567 = sld [smem:[#allocation7 + $0x54]]
        %v1568 = vstv %s1567
        %v1569 = vmul.f32 %v1568, %v684
        %v1570 = vadd.f32 %v1566, %v1569
        %s1571 = sld [smem:[#allocation7 + $0x24]]
        %v1572 = vstv %s1571
        %v1573 = vmul.f32 %v1572, %v710
        %v1574 = vadd.f32 %v1570, %v1573
        %s1575 = sld [smem:[#allocation7 + $0x55]]
        %v1576 = vstv %s1575
        %v1577 = vmul.f32 %v1576, %v735
        %v1578 = vadd.f32 %v1574, %v1577
        %s1579 = sld [smem:[#allocation7 + $0x25]]
        %v1580 = vstv %s1579
        %v1581 = vmul.f32 %v1580, %v761
        %v1582 = vadd.f32 %v1578, %v1581
        %s1583 = sld [smem:[#allocation7 + $0x56]]
        %v1584 = vstv %s1583
        %v1585 = vmul.f32 %v1584, %v786
        %v1586 = vadd.f32 %v1582, %v1585
        %s1587 = sld [smem:[#allocation7 + $0x26]]
        %v1588 = vstv %s1587
        %v1589 = vmul.f32 %v1588, %v618
        %v1590 = vmul.f32 %v1588, %v619
        %v1593 = vcombine.low %v1589, %v1590
        %v1595 = vunpack.c.l.s4 1966171168
        %v1596 = vunpack.c.0.s8 %v1595
        %v1597 = vlaneseq
        %v1598 = vshrl.u32 %v1597, 7
        %v1599 = vsub.s32 %v1596, %v1598
        %v1600 = vrot.slane %v1593, %v1599
        %v1602 = vunpack.c.l.s4 1966171168
        %v1603 = vunpack.c.0.s8 %v1602
        %v1604 = vlaneseq
        %v1605 = vshrl.u32 %v1604, 7
        %v1606 = vsub.s32 %v1603, %v1605
        %v1607 = vrot.slane %v1600, %v1606
        %v1609 = vadd.f32 %v1586, %v1607
        %s1610 = sld [smem:[#allocation7 + $0x57]]
        %v1611 = vstv %s1610
        %v1612 = vmul.f32 %v1611, %v625
        %v1613 = vmul.f32 %v1611, %v631
        %v1616 = vcombine.low %v1612, %v1613
        %v1618 = vunpack.c.l.s4 1966171168
        %v1619 = vunpack.c.0.s8 %v1618
        %v1620 = vlaneseq
        %v1621 = vshrl.u32 %v1620, 7
        %v1622 = vsub.s32 %v1619, %v1621
        %v1623 = vrot.slane %v1616, %v1622
        %v1625 = vunpack.c.l.s4 1966171168
        %v1626 = vunpack.c.0.s8 %v1625
        %v1627 = vlaneseq
        %v1628 = vshrl.u32 %v1627, 7
        %v1629 = vsub.s32 %v1626, %v1628
        %v1630 = vrot.slane %v1623, %v1629
        %v1632 = vadd.f32 %v1609, %v1630
        %s1633 = sld [smem:[#allocation7 + $0x27]]
        %v1634 = vstv %s1633
        %v1635 = vmul.f32 %v1634, %v812
        %v1636 = vadd.f32 %v1632, %v1635
        %s1637 = sld [smem:[#allocation7 + $0x58]]
        %v1638 = vstv %s1637
        %v1639 = vmul.f32 %v1638, %v837
        %v1640 = vadd.f32 %v1636, %v1639
        %s1641 = sld [smem:[#allocation7 + $0x28]]
        %v1642 = vstv %s1641
        %v1643 = vmul.f32 %v1642, %v863
        %v1644 = vadd.f32 %v1640, %v1643
        %s1645 = sld [smem:[#allocation7 + $0x59]]
        %v1646 = vstv %s1645
        %v1647 = vmul.f32 %v1646, %v888
        %v1648 = vadd.f32 %v1644, %v1647
        %s1649 = sld [smem:[#allocation7 + $0x29]]
        %v1650 = vstv %s1649
        %v1651 = vmul.f32 %v1650, %v914
        %v1652 = vadd.f32 %v1648, %v1651
        %s1653 = sld [smem:[#allocation7 + $0x5a]]
        %v1654 = vstv %s1653
        %v1655 = vmul.f32 %v1654, %v939
        %v1656 = vadd.f32 %v1652, %v1655
        %v1658 = vlaneseq
        %v1659 = vshrl.u32 %v1658, 7
        %v1660 = vsub.s32 0, %v1659
        %v1661 = vrot.slane %v1656, %v1660
        %v1662 = vlaneseq
        %v1663 = vshrl.u32 %v1662, 7
        %v1664 = vsub.s32 1, %v1663
        %v1665 = vrot.slane %v1656, %v1664
        %1668 = vrot.lane.b32.xlu0 %v1661, 96
        %v1669 = vpop.permute.xlu0 %1668
        %1670 = vrot.lane.b32.xlu0 %v1665, 96
        %v1671 = vpop.permute.xlu0 %1670
        %vm1672 = vcmp.lt.s32.totalorder %v637, 96
        %v1673 = vsel %vm1672, %v1669, %v1671
        %v1674 = vsel %vm1672, %v1671, %v1669
        %v1677 = vcombine.low %v1673, %v1674
        %v1679 = vunpack.c.l.s4 1966171168
        %v1680 = vunpack.c.0.s8 %v1679
        %v1681 = vlaneseq
        %v1682 = vshrl.u32 %v1681, 7
        %v1683 = vsub.s32 %v1680, %v1682
        %v1684 = vrot.slane %v1677, %v1683
        %v1686 = vunpack.c.l.s4 1966171168
        %v1687 = vunpack.c.0.s8 %v1686
        %v1688 = vlaneseq
        %v1689 = vshrl.u32 %v1688, 7
        %v1690 = vsub.s32 %v1687, %v1689
        %v1691 = vrot.slane %v1684, %v1690
        %v1693 = vsel %vm409, %v1691, 0.0
        %v1694 = vadd.f32 %v1562, %v1693
        %s1695 = sld [smem:[#allocation7 + $0x2a]]
        %v1696 = vstv %s1695
        %v1697 = vmul.f32 %v1696, %v659
        %v1698 = vadd.f32 %v1697, 0.0
        %s1699 = sld [smem:[#allocation7 + $0x5b]]
        %v1700 = vstv %s1699
        %v1701 = vmul.f32 %v1700, %v684
        %v1702 = vadd.f32 %v1698, %v1701
        %s1703 = sld [smem:[#allocation7 + $0x2b]]
        %v1704 = vstv %s1703
        %v1705 = vmul.f32 %v1704, %v710
        %v1706 = vadd.f32 %v1702, %v1705
        %s1707 = sld [smem:[#allocation7 + $0x5c]]
        %v1708 = vstv %s1707
        %v1709 = vmul.f32 %v1708, %v735
        %v1710 = vadd.f32 %v1706, %v1709
        %s1711 = sld [smem:[#allocation7 + $0x2c]]
        %v1712 = vstv %s1711
        %v1713 = vmul.f32 %v1712, %v761
        %v1714 = vadd.f32 %v1710, %v1713
        %s1715 = sld [smem:[#allocation7 + $0x5d]]
        %v1716 = vstv %s1715
        %v1717 = vmul.f32 %v1716, %v786
        %v1718 = vadd.f32 %v1714, %v1717
        %s1719 = sld [smem:[#allocation7 + $0x2d]]
        %v1720 = vstv %s1719
        %v1721 = vmul.f32 %v1720, %v618
        %v1722 = vmul.f32 %v1720, %v619
        %v1725 = vcombine.low %v1721, %v1722
        %v1727 = vunpack.c.l.s4 1966171168
        %v1728 = vunpack.c.0.s8 %v1727
        %v1729 = vlaneseq
        %v1730 = vshrl.u32 %v1729, 7
        %v1731 = vsub.s32 %v1728, %v1730
        %v1732 = vrot.slane %v1725, %v1731
        %v1734 = vunpack.c.l.s4 1966171168
        %v1735 = vunpack.c.0.s8 %v1734
        %v1736 = vlaneseq
        %v1737 = vshrl.u32 %v1736, 7
        %v1738 = vsub.s32 %v1735, %v1737
        %v1739 = vrot.slane %v1732, %v1738
        %v1741 = vadd.f32 %v1718, %v1739
        %s1742 = sld [smem:[#allocation7 + $0x5e]]
        %v1743 = vstv %s1742
        %v1744 = vmul.f32 %v1743, %v625
        %v1745 = vmul.f32 %v1743, %v631
        %v1748 = vcombine.low %v1744, %v1745
        %v1750 = vunpack.c.l.s4 1966171168
        %v1751 = vunpack.c.0.s8 %v1750
        %v1752 = vlaneseq
        %v1753 = vshrl.u32 %v1752, 7
        %v1754 = vsub.s32 %v1751, %v1753
        %v1755 = vrot.slane %v1748, %v1754
        %v1757 = vunpack.c.l.s4 1966171168
        %v1758 = vunpack.c.0.s8 %v1757
        %v1759 = vlaneseq
        %v1760 = vshrl.u32 %v1759, 7
        %v1761 = vsub.s32 %v1758, %v1760
        %v1762 = vrot.slane %v1755, %v1761
        %v1764 = vadd.f32 %v1741, %v1762
        %s1765 = sld [smem:[#allocation7 + $0x2e]]
        %v1766 = vstv %s1765
        %v1767 = vmul.f32 %v1766, %v812
        %v1768 = vadd.f32 %v1764, %v1767
        %s1769 = sld [smem:[#allocation7 + $0x5f]]
        %v1770 = vstv %s1769
        %v1771 = vmul.f32 %v1770, %v837
        %v1772 = vadd.f32 %v1768, %v1771
        %s1773 = sld [smem:[#allocation7 + $0x2f]]
        %v1774 = vstv %s1773
        %v1775 = vmul.f32 %v1774, %v863
        %v1776 = vadd.f32 %v1772, %v1775
        %s1777 = sld [smem:[#allocation7 + $0x60]]
        %v1778 = vstv %s1777
        %v1779 = vmul.f32 %v1778, %v888
        %v1780 = vadd.f32 %v1776, %v1779
        %s1781 = sld [smem:[#allocation7 + $0x30]]
        %v1782 = vstv %s1781
        %v1783 = vmul.f32 %v1782, %v914
        %v1784 = vadd.f32 %v1780, %v1783
        %s1785 = sld [smem:[#allocation7 + $0x61]]
        %v1786 = vstv %s1785
        %v1787 = vmul.f32 %v1786, %v939
        %v1788 = vadd.f32 %v1784, %v1787
        %v1790 = vlaneseq
        %v1791 = vshrl.u32 %v1790, 7
        %v1792 = vsub.s32 0, %v1791
        %v1793 = vrot.slane %v1788, %v1792
        %v1794 = vlaneseq
        %v1795 = vshrl.u32 %v1794, 7
        %v1796 = vsub.s32 1, %v1795
        %v1797 = vrot.slane %v1788, %v1796
        %1800 = vrot.lane.b32.xlu0 %v1793, 80
        %v1801 = vpop.permute.xlu0 %1800
        %1802 = vrot.lane.b32.xlu0 %v1797, 80
        %v1803 = vpop.permute.xlu0 %1802
        %vm1804 = vcmp.lt.s32.totalorder %v637, 80
        %v1805 = vsel %vm1804, %v1801, %v1803
        %v1806 = vsel %vm1804, %v1803, %v1801
        %v1809 = vcombine.low %v1805, %v1806
        %v1811 = vunpack.c.l.s4 1966171168
        %v1812 = vunpack.c.0.s8 %v1811
        %v1813 = vlaneseq
        %v1814 = vshrl.u32 %v1813, 7
        %v1815 = vsub.s32 %v1812, %v1814
        %v1816 = vrot.slane %v1809, %v1815
        %v1818 = vunpack.c.l.s4 1966171168
        %v1819 = vunpack.c.0.s8 %v1818
        %v1820 = vlaneseq
        %v1821 = vshrl.u32 %v1820, 7
        %v1822 = vsub.s32 %v1819, %v1821
        %v1823 = vrot.slane %v1816, %v1822
        %v1825 = vsel %vm417, %v1823, 0.0
        %v1826 = vadd.f32 %v1694, %v1825
        %s1827 = sld [smem:[#allocation2]]
        %v1828 = vstv %s1827
        %v1829 = vadd.f32 %v1826, %v1828
        %v1830 = vxor.u32 %v1829, 2147483648
        %v1831 = vmul.f32 %v1830, 1.442695
        %v1832 = vpow.pop %v1831
        %v1833 = vadd.f32 %v1832, 1.0
        %v1834 = vrcp.pop %v1833
        %v1835 = vmul.f32 1.0, %v1834
        %v1837 = vlaneseq
        %v1838 = vshrl.u32 %v1837, 7
        %v1839 = vsub.s32 0, %v1838
        %v1840 = vrot.slane %v1835, %v1839
        %v1841 = vlaneseq
        %v1842 = vshrl.u32 %v1841, 7
        %v1843 = vsub.s32 1, %v1842
        %v1844 = vrot.slane %v1835, %v1843
        %v1847 = vmul.f32 %v603, %v1840
        %v1848 = vmul.f32 %v604, %v1844
        %1849 = vst [vmem:[%s363] sm:$0xff] %v1847
        %1850 = vst [vmem:[%s363 + $0x8] sm:$0xff] %v1848
        %s1851 = sand.u32 %s230, 1
        %s1852 = scalar_lea.sflag [#allocation5], %s1851
        %s1853 = sand.u32 %s230, 1
        %s1854 = smul.addr %s1853, 16
        %s1855 = scalar_lea.vmem [#allocation8], %s1854
        // Predicated region
        $region65: #{tpu_custom_call.1} parent=55 // pred_check
          %p1856 = pneg %p240
        $region66: #{tpu_custom_call.1} parent=55 // pred_check_branch
          %1858 = sbr.rel (%p1856) target = $region68
        $region67: #{tpu_custom_call.1} parent=55 // pred_region
          %s1860 = ssub.s32 256, 256
          %1861 = vsyncadd %s1852, %s1860
          %s1862 = smul.addr %s28, 2
          %s1863 = smul.addr %s1862, 128
          %s1864 = scalar_lea.hbm %s9, %s1863
          %s1866 = sshll.u32 %s1855, 4
          %s1867 = int_to_ptr.vmem [resolvable:$true] %s1866
          %1869 = dma.vmem_to_hbm [thread:$0]  %s1867, 256, %s1864, %s1852
        $region68: #{tpu_custom_call.1} parent=55 // pred_fallthru
          _
      $region56: #{tpu_custom_call.1} parent=5 // pred_fallthru
        _
      %p1870 = scmp.le.s32.totalorder 2, %s23
      // Predicated region
      $region69: #{tpu_custom_call.1} parent=5 // pred_check
        %p1871 = pneg %p1870
      $region70: #{tpu_custom_call.1} parent=5 // pred_check_branch
        %1873 = sbr.rel (%p1871) target = $region72
      $region71: #{tpu_custom_call.1} parent=5 // pred_region
        %s1874 = ssub.s32 %s23, 2
        // Predicated region
        $region73: #{tpu_custom_call.1} parent=71 // pred_check
          %p1875 = pneg %p246
        $region74: #{tpu_custom_call.1} parent=71 // pred_check_branch
          %1877 = sbr.rel (%p1875) target = $region76
        $region75: #{tpu_custom_call.1} parent=71 // pred_region
          %s1878 = sand.u32 %s231, 1
          %s1879 = scalar_lea.sflag [#allocation5], %s1878
          %s1880 = sand.u32 %s231, 1
          %s1881 = smul.addr %s1880, 16
          %s1882 = scalar_lea.vmem [#allocation8], %s1881
          %1883 = dma.done %s1879, 256
        $region76: #{tpu_custom_call.1} parent=71 // pred_fallthru
          _
      $region72: #{tpu_custom_call.1} parent=5 // pred_fallthru
        _
    $region6: #{tpu_custom_call.1} parent=1 // loop_footer
      %s27 = sadd.s32 1, %s23
    $region7: #{tpu_custom_call.1} parent=1 // loop_footer_branch
      %22 = sbr.rel target = $region3
    $region8: #{tpu_custom_call.1} parent=1 // loop_exit
      _
    %1884 = vsyncpa [#allocation4], 1
    %s1885 = scalar_lea.sflag [#allocation4], 1
    %1886 = vsyncpa %s1885, 1
    %1887 = vsyncpa [#allocation5], 1
    %s1888 = scalar_lea.sflag [#allocation5], 1
    %1889 = vsyncpa %s1888, 1
    %1890 = vsyncpa [#allocation6], 1
    %s1891 = scalar_lea.sflag [#allocation6], 1
    %1892 = vsyncpa %s1891, 1

</llo_original>
